<compile_context>
chip_gen: v7x
topology: tpu7x:2x2x1
jax: 0.10.0
libtpu: 0.0.40
codegen_flags: <defaults>
</compile_context>

<pallas_src>
import functools

import jax
import jax.numpy as jnp
from jax import lax
from jax.experimental import pallas as pl
from jax.experimental.pallas import tpu as pltpu


def _layer_norm(h, gamma, beta, eps=1e-5):
    # f32 throughout; rsqrt lowers to the EUP slot.
    mu = jnp.mean(h, axis=-1, keepdims=True)
    var = jnp.mean((h - mu) ** 2, axis=-1, keepdims=True)
    return (h - mu) * lax.rsqrt(var + eps) * gamma + beta


def _encoder_layer_kernel(
    x_ref, mask_ref,
    wq_ref, wk_ref, wv_ref, bq_ref, bk_ref, bv_ref,
    wo_ref, bo_ref,
    g1_ref, be1_ref,
    w1_ref, b1_ref, w2_ref, b2_ref,
    g2_ref, be2_ref,
    o_ref,
    *, num_heads,
):
    Bt, S, E = x_ref.shape
    H = num_heads
    Dh = E // H
    scale = 1.0 / (Dh ** 0.5)

    # Merge (batch-tile, seq) into one row axis so every projection / FFN
    # matmul feeds the MXU with Bt*S rows (leading-dim merge: no relayout).
    x = x_ref[...].reshape(Bt * S, E)                        # f32
    x_bf = x.astype(jnp.bfloat16)

    # --- Q / K / V projections (bf16 MXU inputs, f32 accumulation) ---
    # Three separate dots: same MXU FLOPs as a fused (E, 3E) matmul but no
    # sub-128 lane slicing of the result (E=32 slices would cross vreg tiles).
    q = jnp.dot(x_bf, wq_ref[...], preferred_element_type=jnp.float32) + bq_ref[...]
    k = jnp.dot(x_bf, wk_ref[...], preferred_element_type=jnp.float32) + bk_ref[...]
    v = jnp.dot(x_bf, wv_ref[...], preferred_element_type=jnp.float32) + bv_ref[...]
    q = q * scale                        # fold 1/sqrt(Dh) into q once

    # (Bt*S, E) -> (Bt*H, S, Dh): one relayout per tensor, batched over Bt*H.
    # TODO(synk): at production S/E the H<->S swap is a real XLU relayout; use
    # pltpu.einshape / dot_general batch-dim placement to avoid moving heads.
    def heads(t):
        return jnp.transpose(t.reshape(Bt, S, H, Dh), (0, 2, 1, 3)
                             ).reshape(Bt * H, S, Dh)

    qh = heads(q).astype(jnp.bfloat16)
    kh = heads(k).astype(jnp.bfloat16)
    vh = heads(v).astype(jnp.bfloat16)

    # Key padding bias: 0 for valid keys, -1e30 for padded keys (f32).
    # TODO(synk): PyTorch yields NaN rows when *every* key of a sequence is
    # padded; we assume at least one valid key per sequence.
    kb = jnp.where(mask_ref[...] > 0.5, 0.0, -1e30)          # (Bt, 1, S)
    kb = jnp.broadcast_to(kb, (Bt, H, S)).reshape(Bt * H, 1, S)

    # --- self attention: all (batch, head) pairs in one batched einsum pair ---
    s = jnp.einsum("bqd,bkd->bqk", qh, kh,
                   preferred_element_type=jnp.float32) + kb
    s = s - jnp.max(s, axis=-1, keepdims=True)               # f32 softmax
    p = jnp.exp(s)
    denom = jnp.sum(p, axis=-1, keepdims=True)
    p = p * pl.reciprocal(denom, approx=True)                # EUP, not VPU div
    ctx = jnp.einsum("bqk,bkd->bqd", p.astype(jnp.bfloat16), vh,
                     preferred_element_type=jnp.float32)     # (Bt*H, S, Dh)
    # TODO(synk): for large S, switch to flash-style online softmax over key
    # tiles (running max / denominator in VMEM scratch) so the (H, S, S) score
    # tensor never materializes — required to fit v7x's 64 MiB VMEM at S >~ 2k.
    ctx = jnp.transpose(ctx.reshape(Bt, H, S, Dh), (0, 2, 1, 3)
                        ).reshape(Bt * S, E)

    attn = jnp.dot(ctx.astype(jnp.bfloat16), wo_ref[...],
                   preferred_element_type=jnp.float32) + bo_ref[...]

    # --- residual + LayerNorm 1 (f32) ---
    y1 = _layer_norm(x + attn, g1_ref[...], be1_ref[...])

    # --- FFN: Linear -> ReLU -> Linear (bf16 MXU inputs, f32 accumulation) ---
    h = jnp.dot(y1.astype(jnp.bfloat16), w1_ref[...],
                preferred_element_type=jnp.float32) + b1_ref[...]
    h = jnp.maximum(h, 0.0)
    ffn = jnp.dot(h.astype(jnp.bfloat16), w2_ref[...],
                  preferred_element_type=jnp.float32) + b2_ref[...]

    # --- residual + LayerNorm 2 (f32) ---
    y2 = _layer_norm(y1 + ffn, g2_ref[...], be2_ref[...])
    # TODO(synk): with E=32 the store is a masked vst; production embed dims
    # >= 128 (lane-dense output) are the single biggest layout lever.
    o_ref[...] = y2.reshape(Bt, S, E).astype(o_ref.dtype)


def custom_transformer_encoder_layer(x, masks, params, num_heads, *,
                                     batch_tile=None,
                                     single_buffer_weights=False,
                                     vmem_limit_bytes=64 * 1024 * 1024):
    """x: (B, S, E) f32, masks: (B, S) f32 (1 = valid, 0 = pad).

    Per-generation tuning:
      * v7x: default batch_tile (grid >= 2 -> both TensorCores); set
        single_buffer_weights=True at production sizes and keep
        vmem_limit_bytes <= ~48 MiB.
      * v5e/v6e: pass batch_tile=B (largest resident tile, amortizes the
        ~0.35 us per-grid-step overhead) and raise vmem_limit_bytes if needed.
    """
    B, S, E = x.shape
    Fh = params["w1"].shape[1]
    if batch_tile is None:
        batch_tile = B // 2 if (B >= 2 and B % 2 == 0) else B
    bt = batch_tile
    assert B % bt == 0, "batch must be divisible by batch_tile"
    masks3 = masks.reshape(B, 1, S).astype(jnp.float32)

    def wspec(shape):
        # Constant index_map -> block fetched once across the batch grid.
        # Buffered(1) drops the (useless) second weight buffer on v7x.
        if single_buffer_weights:
            return pl.BlockSpec(shape, lambda b: (0, 0),
                                pipeline_mode=pl.Buffered(1))
        return pl.BlockSpec(shape, lambda b: (0, 0))

    grid_spec = pltpu.PrefetchScalarGridSpec(
        num_scalar_prefetch=0,
        grid=(B // bt,),
        in_specs=[
            pl.BlockSpec((bt, S, E), lambda b: (b, 0, 0)),    # x
            pl.BlockSpec((bt, 1, S), lambda b: (b, 0, 0)),    # masks
            wspec((E, E)), wspec((E, E)), wspec((E, E)),      # Wq, Wk, Wv (bf16)
            wspec((1, E)), wspec((1, E)), wspec((1, E)),      # bq, bk, bv
            wspec((E, E)), wspec((1, E)),                     # out_proj
            wspec((1, E)), wspec((1, E)),                     # norm1 gamma/beta
            wspec((E, Fh)), wspec((1, Fh)),                   # ffn linear1
            wspec((Fh, E)), wspec((1, E)),                    # ffn linear2
            wspec((1, E)), wspec((1, E)),                     # norm2 gamma/beta
        ],
        out_specs=pl.BlockSpec((bt, S, E), lambda b: (b, 0, 0)),
    )

    args = (
        x, masks3,
        params["wq"], params["wk"], params["wv"],
        params["bq"], params["bk"], params["bv"],
        params["wo"], params["bo"],
        params["g1"], params["be1"],
        params["w1"], params["b1"], params["w2"], params["b2"],
        params["g2"], params["be2"],
    )

    Dh = E // num_heads

    def nbytes(a):
        return int(a.size) * a.dtype.itemsize

    cost = pl.CostEstimate(
        flops=int(2 * B * S * (4 * E * E + 2 * E * Fh)
                  + 4 * B * num_heads * S * S * Dh),
        transcendentals=int(B * num_heads * S * S + 4 * B * S),
        bytes_accessed=int(2 * nbytes(x) + nbytes(masks3)
                           + sum(nbytes(a) for a in args[2:])),
    )

    return pl.pallas_call(
        functools.partial(_encoder_layer_kernel, num_heads=num_heads),
        out_shape=jax.ShapeDtypeStruct((B, S, E), x.dtype),
        grid_spec=grid_spec,
        cost_estimate=cost,
        compiler_params=pltpu.CompilerParams(
            dimension_semantics=("parallel",),
            vmem_limit_bytes=vmem_limit_bytes,
        ),
    )(*args)


def init_params(key, embed_dim, ffn_hidden_dim):
    ks = jax.random.split(key, 12)
    E, Fh = embed_dim, ffn_hidden_dim
    s = 0.1
    bf = jnp.bfloat16
    # Big matmul weights are stored pre-cast to bf16 (no per-call astype pass
    # over HBM); biases and LayerNorm params stay f32.
    return {
        # MultiheadAttention in_proj, stored as separate (E, E) mats so the
        # kernel does x @ W with no lane-axis slicing of a fused result.
        "wq": (s * jax.random.normal(ks[0], (E, E), jnp.float32)).astype(bf),
        "wk": (s * jax.random.normal(ks[1], (E, E), jnp.float32)).astype(bf),
        "wv": (s * jax.random.normal(ks[2], (E, E), jnp.float32)).astype(bf),
        "bq": s * jax.random.normal(ks[3], (1, E), jnp.float32),
        "bk": s * jax.random.normal(ks[4], (1, E), jnp.float32),
        "bv": s * jax.random.normal(ks[5], (1, E), jnp.float32),
        # out_proj
        "wo": (s * jax.random.normal(ks[6], (E, E), jnp.float32)).astype(bf),
        "bo": s * jax.random.normal(ks[7], (1, E), jnp.float32),
        # LayerNorm 1 (PyTorch default init: weight=1, bias=0)
        "g1": jnp.ones((1, E), jnp.float32),
        "be1": jnp.zeros((1, E), jnp.float32),
        # FFN
        "w1": (s * jax.random.normal(ks[8], (E, Fh), jnp.float32)).astype(bf),
        "b1": s * jax.random.normal(ks[9], (1, Fh), jnp.float32),
        "w2": (s * jax.random.normal(ks[10], (Fh, E), jnp.float32)).astype(bf),
        "b2": s * jax.random.normal(ks[11], (1, E), jnp.float32),
        # LayerNorm 2
        "g2": jnp.ones((1, E), jnp.float32),
        "be2": jnp.zeros((1, E), jnp.float32),
    }


def _reference(x, masks, params, num_heads):
    """Pure-JAX f32 reference of the PyTorch forward pass."""
    B, S, E = x.shape
    H = num_heads
    Dh = E // H
    f32 = lambda a: a.astype(jnp.float32)
    q = x @ f32(params["wq"]) + params["bq"]
    k = x @ f32(params["wk"]) + params["bk"]
    v = x @ f32(params["wv"]) + params["bv"]
    q = q.reshape(B, S, H, Dh).transpose(0, 2, 1, 3)
    k = k.reshape(B, S, H, Dh).transpose(0, 2, 1, 3)
    v = v.reshape(B, S, H, Dh).transpose(0, 2, 1, 3)
    s = jnp.einsum("bhqd,bhkd->bhqk", q, k) / (Dh ** 0.5)
    bias = jnp.where(masks[:, None, None, :] > 0.5, 0.0, -1e30)
    p = jax.nn.softmax(s + bias, axis=-1)
    ctx = jnp.einsum("bhqk,bhkd->bhqd", p, v).transpose(0, 2, 1, 3)
    attn = ctx.reshape(B, S, E) @ f32(params["wo"]) + params["bo"]

    def ln(h, g, b):
        mu = h.mean(-1, keepdims=True)
        var = ((h - mu) ** 2).mean(-1, keepdims=True)
        return (h - mu) / jnp.sqrt(var + 1e-5) * g + b

    y1 = ln(x + attn, params["g1"], params["be1"])
    h = jax.nn.relu(y1 @ f32(params["w1"]) + params["b1"])
    return ln(y1 + h @ f32(params["w2"]) + params["b2"],
              params["g2"], params["be2"])


if __name__ == "__main__":
    B, S, E, H, Fh = 2, 8, 32, 4, 64
    key = jax.random.PRNGKey(0)
    kx, kp = jax.random.split(key)

    x = jax.random.normal(kx, (B, S, E), jnp.float32)
    # masks: 1 = valid token, 0 = padded (last two positions padded)
    masks = jnp.ones((B, S), jnp.float32).at[:, -2:].set(0.0)

    params = init_params(kp, E, Fh)

    out = custom_transformer_encoder_layer(x, masks, params, H)
    out = jax.block_until_ready(out)

    assert out.shape == (B, S, E)
    assert bool(jnp.all(jnp.isfinite(out)))

    # Loose check vs f32 reference (kernel matmuls run in bf16).
    ref = _reference(x, masks, params, H)
    max_err = float(jnp.max(jnp.abs(out - ref)))
    assert max_err < 0.1, f"mismatch vs reference: {max_err}"

    print("KERNEL_OK")
</pallas_src>

<mosaic_0001>
module attributes {stable_mosaic.version = 11 : i64} {
  func.func @_encoder_layer_kernel(%arg0: i32, %arg1: memref<1x8x32xf32, #tpu.memory_space<vmem>>, %arg2: memref<1x1x8xf32, #tpu.memory_space<vmem>>, %arg3: memref<32x32xbf16, #tpu.memory_space<vmem>>, %arg4: memref<32x32xbf16, #tpu.memory_space<vmem>>, %arg5: memref<32x32xbf16, #tpu.memory_space<vmem>>, %arg6: memref<1x32xf32, #tpu.memory_space<vmem>>, %arg7: memref<1x32xf32, #tpu.memory_space<vmem>>, %arg8: memref<1x32xf32, #tpu.memory_space<vmem>>, %arg9: memref<32x32xbf16, #tpu.memory_space<vmem>>, %arg10: memref<1x32xf32, #tpu.memory_space<vmem>>, %arg11: memref<1x32xf32, #tpu.memory_space<vmem>>, %arg12: memref<1x32xf32, #tpu.memory_space<vmem>>, %arg13: memref<32x64xbf16, #tpu.memory_space<vmem>>, %arg14: memref<1x64xf32, #tpu.memory_space<vmem>>, %arg15: memref<64x32xbf16, #tpu.memory_space<vmem>>, %arg16: memref<1x32xf32, #tpu.memory_space<vmem>>, %arg17: memref<1x32xf32, #tpu.memory_space<vmem>>, %arg18: memref<1x32xf32, #tpu.memory_space<vmem>>, %arg19: memref<1x8x32xf32, #tpu.memory_space<vmem>>) attributes {dimension_semantics = [#tpu.dimension_semantics<parallel>], iteration_bounds = array<i64: 2>, scalar_prefetch = 0 : i64, scratch_operands = 0 : i64, tpu.core_type = #tpu.core_type<tc>, window_params = [{transform_indices = @transform_0, window_bounds = array<i64: 1, 8, 32>}, {transform_indices = @transform_1, window_bounds = array<i64: 1, 1, 8>}, {pipeline_mode = #tpu.pipeline_mode<synchronous>, transform_indices = @transform_2, window_bounds = array<i64: 32, 32>}, {pipeline_mode = #tpu.pipeline_mode<synchronous>, transform_indices = @transform_3, window_bounds = array<i64: 32, 32>}, {pipeline_mode = #tpu.pipeline_mode<synchronous>, transform_indices = @transform_4, window_bounds = array<i64: 32, 32>}, {pipeline_mode = #tpu.pipeline_mode<synchronous>, transform_indices = @transform_5, window_bounds = array<i64: 1, 32>}, {pipeline_mode = #tpu.pipeline_mode<synchronous>, transform_indices = @transform_6, window_bounds = array<i64: 1, 32>}, {pipeline_mode = #tpu.pipeline_mode<synchronous>, transform_indices = @transform_7, window_bounds = array<i64: 1, 32>}, {pipeline_mode = #tpu.pipeline_mode<synchronous>, transform_indices = @transform_8, window_bounds = array<i64: 32, 32>}, {pipeline_mode = #tpu.pipeline_mode<synchronous>, transform_indices = @transform_9, window_bounds = array<i64: 1, 32>}, {pipeline_mode = #tpu.pipeline_mode<synchronous>, transform_indices = @transform_10, window_bounds = array<i64: 1, 32>}, {pipeline_mode = #tpu.pipeline_mode<synchronous>, transform_indices = @transform_11, window_bounds = array<i64: 1, 32>}, {pipeline_mode = #tpu.pipeline_mode<synchronous>, transform_indices = @transform_12, window_bounds = array<i64: 32, 64>}, {pipeline_mode = #tpu.pipeline_mode<synchronous>, transform_indices = @transform_13, window_bounds = array<i64: 1, 64>}, {pipeline_mode = #tpu.pipeline_mode<synchronous>, transform_indices = @transform_14, window_bounds = array<i64: 64, 32>}, {pipeline_mode = #tpu.pipeline_mode<synchronous>, transform_indices = @transform_15, window_bounds = array<i64: 1, 32>}, {pipeline_mode = #tpu.pipeline_mode<synchronous>, transform_indices = @transform_16, window_bounds = array<i64: 1, 32>}, {pipeline_mode = #tpu.pipeline_mode<synchronous>, transform_indices = @transform_17, window_bounds = array<i64: 1, 32>}, {transform_indices = @transform_18, window_bounds = array<i64: 1, 8, 32>}]} {
    %c0 = arith.constant 0 : index
    %c0_0 = arith.constant 0 : index
    %c0_1 = arith.constant 0 : index
    %0 = vector.load %arg1[%c0, %c0_0, %c0_1] : memref<1x8x32xf32, #tpu.memory_space<vmem>>, vector<1x8x32xf32>
    %1 = vector.shape_cast %0 : vector<1x8x32xf32> to vector<8x32xf32>
    %2 = arith.truncf %1 : vector<8x32xf32> to vector<8x32xbf16>
    %c0_2 = arith.constant 0 : index
    %c0_3 = arith.constant 0 : index
    %3 = vector.load %arg3[%c0_2, %c0_3] : memref<32x32xbf16, #tpu.memory_space<vmem>>, vector<32x32xbf16>
    %cst = arith.constant dense<0.000000e+00> : vector<8x32xf32>
    %4 = tpu.matmul %2, %3, %cst {dimension_numbers = #tpu.dot_dimension_numbers<[1], [0], [0], [1], [0, 0, 1, 1], [], []>} : vector<8x32xbf16>, vector<32x32xbf16>, vector<8x32xf32> -> vector<8x32xf32>
    %c0_4 = arith.constant 0 : index
    %c0_5 = arith.constant 0 : index
    %5 = vector.load %arg6[%c0_4, %c0_5] : memref<1x32xf32, #tpu.memory_space<vmem>>, vector<1x32xf32>
    %6 = vector.broadcast %5 : vector<1x32xf32> to vector<8x32xf32>
    %7 = arith.addf %4, %6 : vector<8x32xf32>
    %c0_6 = arith.constant 0 : index
    %c0_7 = arith.constant 0 : index
    %8 = vector.load %arg4[%c0_6, %c0_7] : memref<32x32xbf16, #tpu.memory_space<vmem>>, vector<32x32xbf16>
    %cst_8 = arith.constant dense<0.000000e+00> : vector<8x32xf32>
    %9 = tpu.matmul %2, %8, %cst_8 {dimension_numbers = #tpu.dot_dimension_numbers<[1], [0], [0], [1], [0, 0, 1, 1], [], []>} : vector<8x32xbf16>, vector<32x32xbf16>, vector<8x32xf32> -> vector<8x32xf32>
    %c0_9 = arith.constant 0 : index
    %c0_10 = arith.constant 0 : index
    %10 = vector.load %arg7[%c0_9, %c0_10] : memref<1x32xf32, #tpu.memory_space<vmem>>, vector<1x32xf32>
    %11 = vector.broadcast %10 : vector<1x32xf32> to vector<8x32xf32>
    %12 = arith.addf %9, %11 : vector<8x32xf32>
    %c0_11 = arith.constant 0 : index
    %c0_12 = arith.constant 0 : index
    %13 = vector.load %arg5[%c0_11, %c0_12] : memref<32x32xbf16, #tpu.memory_space<vmem>>, vector<32x32xbf16>
    %cst_13 = arith.constant dense<0.000000e+00> : vector<8x32xf32>
    %14 = tpu.matmul %2, %13, %cst_13 {dimension_numbers = #tpu.dot_dimension_numbers<[1], [0], [0], [1], [0, 0, 1, 1], [], []>} : vector<8x32xbf16>, vector<32x32xbf16>, vector<8x32xf32> -> vector<8x32xf32>
    %c0_14 = arith.constant 0 : index
    %c0_15 = arith.constant 0 : index
    %15 = vector.load %arg8[%c0_14, %c0_15] : memref<1x32xf32, #tpu.memory_space<vmem>>, vector<1x32xf32>
    %16 = vector.broadcast %15 : vector<1x32xf32> to vector<8x32xf32>
    %17 = arith.addf %14, %16 : vector<8x32xf32>
    %cst_16 = arith.constant 0.353553385 : f32
    %18 = vector.broadcast %cst_16 : f32 to vector<8x32xf32>
    %19 = arith.mulf %7, %18 : vector<8x32xf32>
    %20 = vector.shape_cast %19 : vector<8x32xf32> to vector<1x8x4x8xf32>
    %21 = tpu.transpose %20, [0, 2, 1, 3] : vector<1x8x4x8xf32> -> vector<1x4x8x8xf32>
    %22 = vector.shape_cast %21 : vector<1x4x8x8xf32> to vector<4x8x8xf32>
    %23 = arith.truncf %22 : vector<4x8x8xf32> to vector<4x8x8xbf16>
    %24 = vector.shape_cast %12 : vector<8x32xf32> to vector<1x8x4x8xf32>
    %25 = tpu.transpose %24, [0, 2, 1, 3] : vector<1x8x4x8xf32> -> vector<1x4x8x8xf32>
    %26 = vector.shape_cast %25 : vector<1x4x8x8xf32> to vector<4x8x8xf32>
    %27 = arith.truncf %26 : vector<4x8x8xf32> to vector<4x8x8xbf16>
    %28 = vector.shape_cast %17 : vector<8x32xf32> to vector<1x8x4x8xf32>
    %29 = tpu.transpose %28, [0, 2, 1, 3] : vector<1x8x4x8xf32> -> vector<1x4x8x8xf32>
    %30 = vector.shape_cast %29 : vector<1x4x8x8xf32> to vector<4x8x8xf32>
    %31 = arith.truncf %30 : vector<4x8x8xf32> to vector<4x8x8xbf16>
    %c0_17 = arith.constant 0 : index
    %c0_18 = arith.constant 0 : index
    %c0_19 = arith.constant 0 : index
    %32 = vector.load %arg2[%c0_17, %c0_18, %c0_19] : memref<1x1x8xf32, #tpu.memory_space<vmem>>, vector<1x1x8xf32>
    %cst_20 = arith.constant 5.000000e-01 : f32
    %33 = vector.broadcast %cst_20 : f32 to vector<1x1x8xf32>
    %34 = arith.cmpf ogt, %32, %33 : vector<1x1x8xf32>
    %cst_21 = arith.constant 0.000000e+00 : f32
    %cst_22 = arith.constant -1.000000e+30 : f32
    %35 = vector.broadcast %cst_21 : f32 to vector<1x1x8xf32>
    %36 = vector.broadcast %cst_22 : f32 to vector<1x1x8xf32>
    %37 = arith.select %34, %35, %36 : vector<1x1x8xi1>, vector<1x1x8xf32>
    %38 = vector.shape_cast %37 : vector<1x1x8xf32> to vector<1x1x8xf32>
    %39 = vector.broadcast %38 : vector<1x1x8xf32> to vector<1x4x8xf32>
    %40 = vector.shape_cast %39 : vector<1x4x8xf32> to vector<4x1x8xf32>
    "tpu.trace_start"() <{level = 10 : i32, message = "bqd,bkd->bqk"}> : () -> ()
    %cst_23 = arith.constant dense<0.000000e+00> : vector<4x8x8xf32>
    %41 = tpu.matmul %23, %27, %cst_23 {dimension_numbers = #tpu.dot_dimension_numbers<[2], [2], [1], [1], [0, 0, 0, 1, 1, 1], [0], [0]>} : vector<4x8x8xbf16>, vector<4x8x8xbf16>, vector<4x8x8xf32> -> vector<4x8x8xf32>
    "tpu.trace_stop"() : () -> ()
    %42 = vector.broadcast %40 : vector<4x1x8xf32> to vector<4x8x8xf32>
    %43 = arith.addf %41, %42 : vector<4x8x8xf32>
    %cst_24 = arith.constant dense<0xFF800000> : vector<4x8xf32>
    %44 = vector.multi_reduction <maximumf>, %43, %cst_24 [2] : vector<4x8x8xf32> to vector<4x8xf32>
    %45 = vector.shape_cast %44 : vector<4x8xf32> to vector<4x8x1xf32>
    %46 = vector.broadcast %45 : vector<4x8x1xf32> to vector<4x8x8xf32>
    %47 = arith.subf %43, %46 : vector<4x8x8xf32>
    %48 = math.exp %47 : vector<4x8x8xf32>
    %cst_25 = arith.constant dense<0.000000e+00> : vector<4x8xf32>
    %49 = vector.multi_reduction <add>, %48, %cst_25 [2] : vector<4x8x8xf32> to vector<4x8xf32>
    %50 = vector.shape_cast %49 : vector<4x8xf32> to vector<4x8x1xf32>
    %51 = tpu.reciprocal %50 {approx = true} : vector<4x8x1xf32> -> vector<4x8x1xf32>
    %52 = vector.broadcast %51 : vector<4x8x1xf32> to vector<4x8x8xf32>
    %53 = arith.mulf %48, %52 : vector<4x8x8xf32>
    %54 = arith.truncf %53 : vector<4x8x8xf32> to vector<4x8x8xbf16>
    "tpu.trace_start"() <{level = 10 : i32, message = "bqk,bkd->bqd"}> : () -> ()
    %cst_26 = arith.constant dense<0.000000e+00> : vector<4x8x8xf32>
    %55 = tpu.matmul %54, %31, %cst_26 {dimension_numbers = #tpu.dot_dimension_numbers<[2], [1], [1], [2], [0, 0, 0, 1, 1, 2], [0], [0]>} : vector<4x8x8xbf16>, vector<4x8x8xbf16>, vector<4x8x8xf32> -> vector<4x8x8xf32>
    "tpu.trace_stop"() : () -> ()
    %56 = vector.shape_cast %55 : vector<4x8x8xf32> to vector<1x4x8x8xf32>
    %57 = tpu.transpose %56, [0, 2, 1, 3] : vector<1x4x8x8xf32> -> vector<1x8x4x8xf32>
    %58 = vector.shape_cast %57 : vector<1x8x4x8xf32> to vector<8x32xf32>
    %59 = arith.truncf %58 : vector<8x32xf32> to vector<8x32xbf16>
    %c0_27 = arith.constant 0 : index
    %c0_28 = arith.constant 0 : index
    %60 = vector.load %arg9[%c0_27, %c0_28] : memref<32x32xbf16, #tpu.memory_space<vmem>>, vector<32x32xbf16>
    %cst_29 = arith.constant dense<0.000000e+00> : vector<8x32xf32>
    %61 = tpu.matmul %59, %60, %cst_29 {dimension_numbers = #tpu.dot_dimension_numbers<[1], [0], [0], [1], [0, 0, 1, 1], [], []>} : vector<8x32xbf16>, vector<32x32xbf16>, vector<8x32xf32> -> vector<8x32xf32>
    %c0_30 = arith.constant 0 : index
    %c0_31 = arith.constant 0 : index
    %62 = vector.load %arg10[%c0_30, %c0_31] : memref<1x32xf32, #tpu.memory_space<vmem>>, vector<1x32xf32>
    %63 = vector.broadcast %62 : vector<1x32xf32> to vector<8x32xf32>
    %64 = arith.addf %61, %63 : vector<8x32xf32>
    %65 = arith.addf %1, %64 : vector<8x32xf32>
    %c0_32 = arith.constant 0 : index
    %c0_33 = arith.constant 0 : index
    %66 = vector.load %arg11[%c0_32, %c0_33] : memref<1x32xf32, #tpu.memory_space<vmem>>, vector<1x32xf32>
    %c0_34 = arith.constant 0 : index
    %c0_35 = arith.constant 0 : index
    %67 = vector.load %arg12[%c0_34, %c0_35] : memref<1x32xf32, #tpu.memory_space<vmem>>, vector<1x32xf32>
    %cst_36 = arith.constant dense<0.000000e+00> : vector<8xf32>
    %68 = vector.multi_reduction <add>, %65, %cst_36 [1] : vector<8x32xf32> to vector<8xf32>
    %69 = vector.shape_cast %68 : vector<8xf32> to vector<8x1xf32>
    %cst_37 = arith.constant 3.200000e+01 : f32
    %70 = vector.broadcast %cst_37 : f32 to vector<8x1xf32>
    %71 = arith.divf %69, %70 : vector<8x1xf32>
    %72 = vector.broadcast %71 : vector<8x1xf32> to vector<8x32xf32>
    %73 = arith.subf %65, %72 : vector<8x32xf32>
    %74 = arith.mulf %73, %73 : vector<8x32xf32>
    %cst_38 = arith.constant dense<0.000000e+00> : vector<8xf32>
    %75 = vector.multi_reduction <add>, %74, %cst_38 [1] : vector<8x32xf32> to vector<8xf32>
    %76 = vector.shape_cast %75 : vector<8xf32> to vector<8x1xf32>
    %cst_39 = arith.constant 3.200000e+01 : f32
    %77 = vector.broadcast %cst_39 : f32 to vector<8x1xf32>
    %78 = arith.divf %76, %77 : vector<8x1xf32>
    %79 = vector.broadcast %71 : vector<8x1xf32> to vector<8x32xf32>
    %80 = arith.subf %65, %79 : vector<8x32xf32>
    %cst_40 = arith.constant 9.99999974E-6 : f32
    %81 = vector.broadcast %cst_40 : f32 to vector<8x1xf32>
    %82 = arith.addf %78, %81 : vector<8x1xf32>
    %83 = math.rsqrt %82 : vector<8x1xf32>
    %84 = vector.broadcast %83 : vector<8x1xf32> to vector<8x32xf32>
    %85 = arith.mulf %80, %84 : vector<8x32xf32>
    %86 = vector.broadcast %66 : vector<1x32xf32> to vector<8x32xf32>
    %87 = arith.mulf %85, %86 : vector<8x32xf32>
    %88 = vector.broadcast %67 : vector<1x32xf32> to vector<8x32xf32>
    %89 = arith.addf %87, %88 : vector<8x32xf32>
    %90 = arith.truncf %89 : vector<8x32xf32> to vector<8x32xbf16>
    %c0_41 = arith.constant 0 : index
    %c0_42 = arith.constant 0 : index
    %91 = vector.load %arg13[%c0_41, %c0_42] : memref<32x64xbf16, #tpu.memory_space<vmem>>, vector<32x64xbf16>
    %cst_43 = arith.constant dense<0.000000e+00> : vector<8x64xf32>
    %92 = tpu.matmul %90, %91, %cst_43 {dimension_numbers = #tpu.dot_dimension_numbers<[1], [0], [0], [1], [0, 0, 1, 1], [], []>} : vector<8x32xbf16>, vector<32x64xbf16>, vector<8x64xf32> -> vector<8x64xf32>
    %c0_44 = arith.constant 0 : index
    %c0_45 = arith.constant 0 : index
    %93 = vector.load %arg14[%c0_44, %c0_45] : memref<1x64xf32, #tpu.memory_space<vmem>>, vector<1x64xf32>
    %94 = vector.broadcast %93 : vector<1x64xf32> to vector<8x64xf32>
    %95 = arith.addf %92, %94 : vector<8x64xf32>
    %cst_46 = arith.constant 0.000000e+00 : f32
    %96 = vector.broadcast %cst_46 : f32 to vector<8x64xf32>
    %97 = arith.maximumf %95, %96 : vector<8x64xf32>
    %98 = arith.truncf %97 : vector<8x64xf32> to vector<8x64xbf16>
    %c0_47 = arith.constant 0 : index
    %c0_48 = arith.constant 0 : index
    %99 = vector.load %arg15[%c0_47, %c0_48] : memref<64x32xbf16, #tpu.memory_space<vmem>>, vector<64x32xbf16>
    %cst_49 = arith.constant dense<0.000000e+00> : vector<8x32xf32>
    %100 = tpu.matmul %98, %99, %cst_49 {dimension_numbers = #tpu.dot_dimension_numbers<[1], [0], [0], [1], [0, 0, 1, 1], [], []>} : vector<8x64xbf16>, vector<64x32xbf16>, vector<8x32xf32> -> vector<8x32xf32>
    %c0_50 = arith.constant 0 : index
    %c0_51 = arith.constant 0 : index
    %101 = vector.load %arg16[%c0_50, %c0_51] : memref<1x32xf32, #tpu.memory_space<vmem>>, vector<1x32xf32>
    %102 = vector.broadcast %101 : vector<1x32xf32> to vector<8x32xf32>
    %103 = arith.addf %100, %102 : vector<8x32xf32>
    %104 = arith.addf %89, %103 : vector<8x32xf32>
    %c0_52 = arith.constant 0 : index
    %c0_53 = arith.constant 0 : index
    %105 = vector.load %arg17[%c0_52, %c0_53] : memref<1x32xf32, #tpu.memory_space<vmem>>, vector<1x32xf32>
    %c0_54 = arith.constant 0 : index
    %c0_55 = arith.constant 0 : index
    %106 = vector.load %arg18[%c0_54, %c0_55] : memref<1x32xf32, #tpu.memory_space<vmem>>, vector<1x32xf32>
    %cst_56 = arith.constant dense<0.000000e+00> : vector<8xf32>
    %107 = vector.multi_reduction <add>, %104, %cst_56 [1] : vector<8x32xf32> to vector<8xf32>
    %108 = vector.shape_cast %107 : vector<8xf32> to vector<8x1xf32>
    %cst_57 = arith.constant 3.200000e+01 : f32
    %109 = vector.broadcast %cst_57 : f32 to vector<8x1xf32>
    %110 = arith.divf %108, %109 : vector<8x1xf32>
    %111 = vector.broadcast %110 : vector<8x1xf32> to vector<8x32xf32>
    %112 = arith.subf %104, %111 : vector<8x32xf32>
    %113 = arith.mulf %112, %112 : vector<8x32xf32>
    %cst_58 = arith.constant dense<0.000000e+00> : vector<8xf32>
    %114 = vector.multi_reduction <add>, %113, %cst_58 [1] : vector<8x32xf32> to vector<8xf32>
    %115 = vector.shape_cast %114 : vector<8xf32> to vector<8x1xf32>
    %cst_59 = arith.constant 3.200000e+01 : f32
    %116 = vector.broadcast %cst_59 : f32 to vector<8x1xf32>
    %117 = arith.divf %115, %116 : vector<8x1xf32>
    %118 = vector.broadcast %110 : vector<8x1xf32> to vector<8x32xf32>
    %119 = arith.subf %104, %118 : vector<8x32xf32>
    %cst_60 = arith.constant 9.99999974E-6 : f32
    %120 = vector.broadcast %cst_60 : f32 to vector<8x1xf32>
    %121 = arith.addf %117, %120 : vector<8x1xf32>
    %122 = math.rsqrt %121 : vector<8x1xf32>
    %123 = vector.broadcast %122 : vector<8x1xf32> to vector<8x32xf32>
    %124 = arith.mulf %119, %123 : vector<8x32xf32>
    %125 = vector.broadcast %105 : vector<1x32xf32> to vector<8x32xf32>
    %126 = arith.mulf %124, %125 : vector<8x32xf32>
    %127 = vector.broadcast %106 : vector<1x32xf32> to vector<8x32xf32>
    %128 = arith.addf %126, %127 : vector<8x32xf32>
    %129 = vector.shape_cast %128 : vector<8x32xf32> to vector<1x8x32xf32>
    %c0_61 = arith.constant 0 : index
    %c0_62 = arith.constant 0 : index
    %c0_63 = arith.constant 0 : index
    %130 = vector.load %arg19[%c0_61, %c0_62, %c0_63] : memref<1x8x32xf32, #tpu.memory_space<vmem>>, vector<1x8x32xf32>
    tpu.vector_store %arg19[%c0_61, %c0_62, %c0_63], %129 {strides = array<i32>} : memref<1x8x32xf32, #tpu.memory_space<vmem>>, vector<1x8x32xf32>,
    return
  }
  func.func @transform_0(%arg0: i32) -> (i32, i32, i32) {
    %c0_i32 = arith.constant 0 : i32
    %c0_i32_0 = arith.constant 0 : i32
    %c0_i32_1 = arith.constant 0 : i32
    return %arg0, %c0_i32, %c0_i32_0 : i32, i32, i32
  }
  func.func @transform_1(%arg0: i32) -> (i32, i32, i32) {
    %c0_i32 = arith.constant 0 : i32
    %c0_i32_0 = arith.constant 0 : i32
    %c0_i32_1 = arith.constant 0 : i32
    return %arg0, %c0_i32, %c0_i32_0 : i32, i32, i32
  }
  func.func @transform_2(%arg0: i32) -> (i32, i32) {
    %c0_i32 = arith.constant 0 : i32
    %c0_i32_0 = arith.constant 0 : i32
    %c0_i32_1 = arith.constant 0 : i32
    return %c0_i32, %c0_i32_0 : i32, i32
  }
  func.func @transform_3(%arg0: i32) -> (i32, i32) {
    %c0_i32 = arith.constant 0 : i32
    %c0_i32_0 = arith.constant 0 : i32
    %c0_i32_1 = arith.constant 0 : i32
    return %c0_i32, %c0_i32_0 : i32, i32
  }
  func.func @transform_4(%arg0: i32) -> (i32, i32) {
    %c0_i32 = arith.constant 0 : i32
    %c0_i32_0 = arith.constant 0 : i32
    %c0_i32_1 = arith.constant 0 : i32
    return %c0_i32, %c0_i32_0 : i32, i32
  }
  func.func @transform_5(%arg0: i32) -> (i32, i32) {
    %c0_i32 = arith.constant 0 : i32
    %c0_i32_0 = arith.constant 0 : i32
    %c0_i32_1 = arith.constant 0 : i32
    return %c0_i32, %c0_i32_0 : i32, i32
  }
  func.func @transform_6(%arg0: i32) -> (i32, i32) {
    %c0_i32 = arith.constant 0 : i32
    %c0_i32_0 = arith.constant 0 : i32
    %c0_i32_1 = arith.constant 0 : i32
    return %c0_i32, %c0_i32_0 : i32, i32
  }
  func.func @transform_7(%arg0: i32) -> (i32, i32) {
    %c0_i32 = arith.constant 0 : i32
    %c0_i32_0 = arith.constant 0 : i32
    %c0_i32_1 = arith.constant 0 : i32
    return %c0_i32, %c0_i32_0 : i32, i32
  }
  func.func @transform_8(%arg0: i32) -> (i32, i32) {
    %c0_i32 = arith.constant 0 : i32
    %c0_i32_0 = arith.constant 0 : i32
    %c0_i32_1 = arith.constant 0 : i32
    return %c0_i32, %c0_i32_0 : i32, i32
  }
  func.func @transform_9(%arg0: i32) -> (i32, i32) {
    %c0_i32 = arith.constant 0 : i32
    %c0_i32_0 = arith.constant 0 : i32
    %c0_i32_1 = arith.constant 0 : i32
    return %c0_i32, %c0_i32_0 : i32, i32
  }
  func.func @transform_10(%arg0: i32) -> (i32, i32) {
    %c0_i32 = arith.constant 0 : i32
    %c0_i32_0 = arith.constant 0 : i32
    %c0_i32_1 = arith.constant 0 : i32
    return %c0_i32, %c0_i32_0 : i32, i32
  }
  func.func @transform_11(%arg0: i32) -> (i32, i32) {
    %c0_i32 = arith.constant 0 : i32
    %c0_i32_0 = arith.constant 0 : i32
    %c0_i32_1 = arith.constant 0 : i32
    return %c0_i32, %c0_i32_0 : i32, i32
  }
  func.func @transform_12(%arg0: i32) -> (i32, i32) {
    %c0_i32 = arith.constant 0 : i32
    %c0_i32_0 = arith.constant 0 : i32
    %c0_i32_1 = arith.constant 0 : i32
    return %c0_i32, %c0_i32_0 : i32, i32
  }
  func.func @transform_13(%arg0: i32) -> (i32, i32) {
    %c0_i32 = arith.constant 0 : i32
    %c0_i32_0 = arith.constant 0 : i32
    %c0_i32_1 = arith.constant 0 : i32
    return %c0_i32, %c0_i32_0 : i32, i32
  }
  func.func @transform_14(%arg0: i32) -> (i32, i32) {
    %c0_i32 = arith.constant 0 : i32
    %c0_i32_0 = arith.constant 0 : i32
    %c0_i32_1 = arith.constant 0 : i32
    return %c0_i32, %c0_i32_0 : i32, i32
  }
  func.func @transform_15(%arg0: i32) -> (i32, i32) {
    %c0_i32 = arith.constant 0 : i32
    %c0_i32_0 = arith.constant 0 : i32
    %c0_i32_1 = arith.constant 0 : i32
    return %c0_i32, %c0_i32_0 : i32, i32
  }
  func.func @transform_16(%arg0: i32) -> (i32, i32) {
    %c0_i32 = arith.constant 0 : i32
    %c0_i32_0 = arith.constant 0 : i32
    %c0_i32_1 = arith.constant 0 : i32
    return %c0_i32, %c0_i32_0 : i32, i32
  }
  func.func @transform_17(%arg0: i32) -> (i32, i32) {
    %c0_i32 = arith.constant 0 : i32
    %c0_i32_0 = arith.constant 0 : i32
    %c0_i32_1 = arith.constant 0 : i32
    return %c0_i32, %c0_i32_0 : i32, i32
  }
  func.func @transform_18(%arg0: i32) -> (i32, i32, i32) {
    %c0_i32 = arith.constant 0 : i32
    %c0_i32_0 = arith.constant 0 : i32
    %c0_i32_1 = arith.constant 0 : i32
    return %arg0, %c0_i32, %c0_i32_0 : i32, i32, i32
  }
}

</mosaic_0001>

<llo_original>
// kernel: tpu_custom_call.1
$region0: #{tpu_custom_call.1}
  #allocation0 [shape = 'u32[]', space=smem, size = 0x4, offset = 0x4, fixed_abs, tag = 'smem constant byte address 0x4 - core index']
  #allocation1 [shape = 'u32[144,128]{1,0:T(1,128)}', space=vmem, size = 0x12000, scoped, tag = 'internal scratch']
  %s0 = inlined_call_operand.hbm [shape: f32[2,8,32], index: 0, kind: input, shape index: {}]
  %s1 = inlined_call_operand.hbm [shape: f32[2,1,8], index: 1, kind: input, shape index: {}]
  %s2 = inlined_call_operand.hbm [shape: bf16[32,32], index: 2, kind: input, shape index: {}]
  %s3 = inlined_call_operand.hbm [shape: bf16[32,32], index: 3, kind: input, shape index: {}]
  %s4 = inlined_call_operand.hbm [shape: bf16[32,32], index: 4, kind: input, shape index: {}]
  %s5 = inlined_call_operand.hbm [shape: f32[1,32], index: 5, kind: input, shape index: {}]
  %s6 = inlined_call_operand.hbm [shape: f32[1,32], index: 6, kind: input, shape index: {}]
  %s7 = inlined_call_operand.hbm [shape: f32[1,32], index: 7, kind: input, shape index: {}]
  %s8 = inlined_call_operand.hbm [shape: bf16[32,32], index: 8, kind: input, shape index: {}]
  %s9 = inlined_call_operand.hbm [shape: f32[1,32], index: 9, kind: input, shape index: {}]
  %s10 = inlined_call_operand.hbm [shape: f32[1,32], index: 10, kind: input, shape index: {}]
  %s11 = inlined_call_operand.hbm [shape: f32[1,32], index: 11, kind: input, shape index: {}]
  %s12 = inlined_call_operand.hbm [shape: bf16[32,64], index: 12, kind: input, shape index: {}]
  %s13 = inlined_call_operand.hbm [shape: f32[1,64], index: 13, kind: input, shape index: {}]
  %s14 = inlined_call_operand.hbm [shape: bf16[64,32], index: 14, kind: input, shape index: {}]
  %s15 = inlined_call_operand.hbm [shape: f32[1,32], index: 15, kind: input, shape index: {}]
  %s16 = inlined_call_operand.hbm [shape: f32[1,32], index: 16, kind: input, shape index: {}]
  %s17 = inlined_call_operand.hbm [shape: f32[1,32], index: 17, kind: input, shape index: {}]
  %s18 = inlined_call_operand.hbm [shape: f32[2,8,32], index: 18, kind: output, shape index: {}]
  %s19 = sld [smem:[#allocation0]]
  $region177: #{tpu_custom_call.1} parent=0
    _
  %s21 = ssub.s32 1, %s19
  %s22 = scalar_select 0, %s21, %s19
  $region1: #{tpu_custom_call.1} parent=0
    #allocation2 [shape = 'u8[8192]{0}', space=vmem, size = 0x2000, scoped, tag = 'input window, operand 0']
    #allocation3 [shape = 's32[2]{0}', space=sflag, size = 0x8, scoped, tag = 'scoped memory for tpu_custom_call.1']
    #allocation4 [shape = 's32[2]{0}', space=sflag, size = 0x8, scoped, tag = 'scoped memory for tpu_custom_call.1']
    #allocation5 [shape = 'u8[1024]{0}', space=vmem, size = 0x400, scoped, tag = 'input window, operand 1']
    #allocation6 [shape = 's32[2]{0}', space=sflag, size = 0x8, scoped, tag = 'scoped memory for tpu_custom_call.1']
    #allocation7 [shape = 'u8[8192]{0}', space=vmem, size = 0x2000, scoped, tag = 'input window, operand 2, single buffered']
    #allocation8 [shape = 'u8[8192]{0}', space=vmem, size = 0x2000, scoped, tag = 'input window, operand 3, single buffered']
    #allocation9 [shape = 's32[1]{0}', space=sflag, size = 0x4, scoped, tag = 'scoped memory for tpu_custom_call.1']
    #allocation10 [shape = 'u8[8192]{0}', space=vmem, size = 0x2000, scoped, tag = 'input window, operand 4, single buffered']
    #allocation11 [shape = 'u8[512]{0}', space=vmem, size = 0x400, scoped, tag = 'input window, operand 5, single buffered']
    #allocation12 [shape = 's32[1]{0}', space=sflag, size = 0x4, scoped, tag = 'scoped memory for tpu_custom_call.1']
    #allocation13 [shape = 'u8[512]{0}', space=vmem, size = 0x400, scoped, tag = 'input window, operand 6, single buffered']
    #allocation14 [shape = 'u8[512]{0}', space=vmem, size = 0x400, scoped, tag = 'input window, operand 7, single buffered']
    #allocation15 [shape = 's32[1]{0}', space=sflag, size = 0x4, scoped, tag = 'scoped memory for tpu_custom_call.1']
    #allocation16 [shape = 'u8[8192]{0}', space=vmem, size = 0x2000, scoped, tag = 'input window, operand 8, single buffered']
    #allocation17 [shape = 'u8[512]{0}', space=vmem, size = 0x400, scoped, tag = 'input window, operand 9, single buffered']
    #allocation18 [shape = 's32[1]{0}', space=sflag, size = 0x4, scoped, tag = 'scoped memory for tpu_custom_call.1']
    #allocation19 [shape = 'u8[512]{0}', space=vmem, size = 0x400, scoped, tag = 'input window, operand 10, single buffered']
    #allocation20 [shape = 'u8[512]{0}', space=vmem, size = 0x400, scoped, tag = 'input window, operand 11, single buffered']
    #allocation21 [shape = 's32[1]{0}', space=sflag, size = 0x4, scoped, tag = 'scoped memory for tpu_custom_call.1']
    #allocation22 [shape = 'u8[8192]{0}', space=vmem, size = 0x2000, scoped, tag = 'input window, operand 12, single buffered']
    #allocation23 [shape = 'u8[512]{0}', space=vmem, size = 0x400, scoped, tag = 'input window, operand 13, single buffered']
    #allocation24 [shape = 's32[1]{0}', space=sflag, size = 0x4, scoped, tag = 'scoped memory for tpu_custom_call.1']
    #allocation25 [shape = 'u8[16384]{0}', space=vmem, size = 0x4000, scoped, tag = 'input window, operand 14, single buffered']
    #allocation26 [shape = 'u8[512]{0}', space=vmem, size = 0x400, scoped, tag = 'input window, operand 15, single buffered']
    #allocation27 [shape = 's32[1]{0}', space=sflag, size = 0x4, scoped, tag = 'scoped memory for tpu_custom_call.1']
    #allocation28 [shape = 'u8[512]{0}', space=vmem, size = 0x400, scoped, tag = 'input window, operand 16, single buffered']
    #allocation29 [shape = 'u8[512]{0}', space=vmem, size = 0x400, scoped, tag = 'input window, operand 17, single buffered']
    #allocation30 [shape = 's32[1]{0}', space=sflag, size = 0x4, scoped, tag = 'scoped memory for tpu_custom_call.1']
    #allocation31 [shape = 'u8[8192]{0}', space=vmem, size = 0x2000, scoped, tag = 'output window, operand 0']
    %23 = vsyncpa [#allocation3], 0
    %s24 = scalar_lea.sflag [#allocation3], 1
    %25 = vsyncpa %s24, 0
    %26 = vsyncpa [#allocation6], 0
    %s27 = scalar_lea.sflag [#allocation6], 1
    %28 = vsyncpa %s27, 0
    %29 = vsyncpa [#allocation9], 0
    %30 = vsyncpa [#allocation12], 0
    %31 = vsyncpa [#allocation15], 0
    %32 = vsyncpa [#allocation18], 0
    %33 = vsyncpa [#allocation21], 0
    %34 = vsyncpa [#allocation24], 0
    %35 = vsyncpa [#allocation27], 0
    %36 = vsyncpa [#allocation30], 0
    %37 = vsyncpa [#allocation4], 0
    %s38 = scalar_lea.sflag [#allocation4], 1
    %39 = vsyncpa %s38, 0
    loop: start=0, step=1, limit=4
    $region2: #{tpu_custom_call.1} parent=1 // loop_pre_header
      _
    $region3: #{tpu_custom_call.1} parent=1 // loop_header
      %s41 = sphi 0, %s45
      %p42 = scmp.ge.s32.totalorder %s41, 4
      %s51 = sphi 0, %s53
      %s54 = sphi 0, %s51
      %s55 = sphi 0, %s54
      %s71 = sphi 0, %s55
      %s77 = sphi 0, %s79
      %s80 = sphi 0, %s77
      %s81 = sphi 0, %s80
      %s97 = sphi 0, %s81
      %s101 = sphi 0, %s101
      %s103 = sphi 0, %s101
      %s104 = sphi 0, %s103
      %s118 = sphi 0, %s104
      %s122 = sphi 0, %s122
      %s124 = sphi 0, %s122
      %s125 = sphi 0, %s124
      %s139 = sphi 0, %s125
      %s143 = sphi 0, %s143
      %s145 = sphi 0, %s143
      %s146 = sphi 0, %s145
      %s160 = sphi 0, %s146
      %s164 = sphi 0, %s164
      %s166 = sphi 0, %s164
      %s167 = sphi 0, %s166
      %s181 = sphi 0, %s167
      %s185 = sphi 0, %s185
      %s187 = sphi 0, %s185
      %s188 = sphi 0, %s187
      %s202 = sphi 0, %s188
      %s206 = sphi 0, %s206
      %s208 = sphi 0, %s206
      %s209 = sphi 0, %s208
      %s223 = sphi 0, %s209
      %s227 = sphi 0, %s227
      %s229 = sphi 0, %s227
      %s230 = sphi 0, %s229
      %s244 = sphi 0, %s230
      %s248 = sphi 0, %s248
      %s250 = sphi 0, %s248
      %s251 = sphi 0, %s250
      %s265 = sphi 0, %s251
      %s269 = sphi 0, %s269
      %s271 = sphi 0, %s269
      %s272 = sphi 0, %s271
      %s286 = sphi 0, %s272
      %s290 = sphi 0, %s290
      %s292 = sphi 0, %s290
      %s293 = sphi 0, %s292
      %s307 = sphi 0, %s293
      %s311 = sphi 0, %s311
      %s313 = sphi 0, %s311
      %s314 = sphi 0, %s313
      %s328 = sphi 0, %s314
      %s332 = sphi 0, %s332
      %s334 = sphi 0, %s332
      %s335 = sphi 0, %s334
      %s349 = sphi 0, %s335
      %s353 = sphi 0, %s353
      %s355 = sphi 0, %s353
      %s356 = sphi 0, %s355
      %s370 = sphi 0, %s356
      %s374 = sphi 0, %s374
      %s376 = sphi 0, %s374
      %s377 = sphi 0, %s376
      %s391 = sphi 0, %s377
      %s395 = sphi 0, %s395
      %s397 = sphi 0, %s395
      %s398 = sphi 0, %s397
      %s412 = sphi 0, %s398
      %s416 = sphi 0, %s416
      %s418 = sphi 0, %s416
      %s419 = sphi 0, %s418
      %s433 = sphi 0, %s419
      %s439 = sphi 0, %s441
      %s442 = sphi 0, %s439
      %s443 = sphi 0, %s442
      %s459 = sphi 0, %s443
    $region4: #{tpu_custom_call.1} parent=1 // loop_header_branch
      %44 = sbr.rel (%p42) target = $region8
    $region5: #{tpu_custom_call.1} parent=1 // loop_body
      %s46 = ssub.s32 %s41, 1
      %s47 = ssub.s32 %s41, 2
      %s48 = sadd.s32 %s41, 1
      %s49 = ssub.s32 %s41, %s48
      %p50 = scmp.eq.s32.totalorder %s49, 0
      %s52 = sadd.s32 %s51, 1
      %s53 = scalar_select %p50, %s51, %s52
      %p56 = pneg %p50
      %p57 = scmp.eq.s32.totalorder %s41, 1
      %p58 = por %p56, %p57
      %p59 = scmp.ne.s32.totalorder %s51, %s54
      %p60 = scmp.eq.s32.totalorder %s41, 0
      %p61 = por %p59, %p60
      %p62 = scmp.ne.s32.totalorder %s51, %s54
      %p63 = scmp.eq.s32.totalorder %s46, 1
      %p64 = por %p62, %p63
      %p65 = scmp.ne.s32.totalorder %s54, %s55
      %p66 = scmp.eq.s32.totalorder %s46, 0
      %p67 = por %p65, %p66
      %p68 = scmp.ne.s32.totalorder %s54, %s55
      %p69 = scmp.eq.s32.totalorder %s47, 1
      %p70 = por %p68, %p69
      %p72 = scmp.ne.s32.totalorder %s55, %s71
      %p73 = scmp.eq.s32.totalorder %s47, 0
      %p74 = por %p72, %p73
      %s75 = ssub.s32 %s41, %s48
      %p76 = scmp.eq.s32.totalorder %s75, 0
      %s78 = sadd.s32 %s77, 1
      %s79 = scalar_select %p76, %s77, %s78
      %p82 = pneg %p76
      %p83 = scmp.eq.s32.totalorder %s41, 1
      %p84 = por %p82, %p83
      %p85 = scmp.ne.s32.totalorder %s77, %s80
      %p86 = scmp.eq.s32.totalorder %s41, 0
      %p87 = por %p85, %p86
      %p88 = scmp.ne.s32.totalorder %s77, %s80
      %p89 = scmp.eq.s32.totalorder %s46, 1
      %p90 = por %p88, %p89
      %p91 = scmp.ne.s32.totalorder %s80, %s81
      %p92 = scmp.eq.s32.totalorder %s46, 0
      %p93 = por %p91, %p92
      %p94 = scmp.ne.s32.totalorder %s80, %s81
      %p95 = scmp.eq.s32.totalorder %s47, 1
      %p96 = por %p94, %p95
      %p98 = scmp.ne.s32.totalorder %s81, %s97
      %p99 = scmp.eq.s32.totalorder %s47, 0
      %p100 = por %p98, %p99
      %s102 = sadd.s32 %s101, 1
      %p105 = scmp.eq.s32.totalorder %s41, 1
      %p106 = scmp.ne.s32.totalorder %s101, %s103
      %p107 = scmp.eq.s32.totalorder %s41, 0
      %p108 = por %p106, %p107
      %p109 = scmp.ne.s32.totalorder %s101, %s103
      %p110 = scmp.eq.s32.totalorder %s46, 1
      %p111 = por %p109, %p110
      %p112 = scmp.ne.s32.totalorder %s103, %s104
      %p113 = scmp.eq.s32.totalorder %s46, 0
      %p114 = por %p112, %p113
      %p115 = scmp.ne.s32.totalorder %s103, %s104
      %p116 = scmp.eq.s32.totalorder %s47, 1
      %p117 = por %p115, %p116
      %p119 = scmp.ne.s32.totalorder %s104, %s118
      %p120 = scmp.eq.s32.totalorder %s47, 0
      %p121 = por %p119, %p120
      %s123 = sadd.s32 %s122, 1
      %p126 = scmp.eq.s32.totalorder %s41, 1
      %p127 = scmp.ne.s32.totalorder %s122, %s124
      %p128 = scmp.eq.s32.totalorder %s41, 0
      %p129 = por %p127, %p128
      %p130 = scmp.ne.s32.totalorder %s122, %s124
      %p131 = scmp.eq.s32.totalorder %s46, 1
      %p132 = por %p130, %p131
      %p133 = scmp.ne.s32.totalorder %s124, %s125
      %p134 = scmp.eq.s32.totalorder %s46, 0
      %p135 = por %p133, %p134
      %p136 = scmp.ne.s32.totalorder %s124, %s125
      %p137 = scmp.eq.s32.totalorder %s47, 1
      %p138 = por %p136, %p137
      %p140 = scmp.ne.s32.totalorder %s125, %s139
      %p141 = scmp.eq.s32.totalorder %s47, 0
      %p142 = por %p140, %p141
      %s144 = sadd.s32 %s143, 1
      %p147 = scmp.eq.s32.totalorder %s41, 1
      %p148 = scmp.ne.s32.totalorder %s143, %s145
      %p149 = scmp.eq.s32.totalorder %s41, 0
      %p150 = por %p148, %p149
      %p151 = scmp.ne.s32.totalorder %s143, %s145
      %p152 = scmp.eq.s32.totalorder %s46, 1
      %p153 = por %p151, %p152
      %p154 = scmp.ne.s32.totalorder %s145, %s146
      %p155 = scmp.eq.s32.totalorder %s46, 0
      %p156 = por %p154, %p155
      %p157 = scmp.ne.s32.totalorder %s145, %s146
      %p158 = scmp.eq.s32.totalorder %s47, 1
      %p159 = por %p157, %p158
      %p161 = scmp.ne.s32.totalorder %s146, %s160
      %p162 = scmp.eq.s32.totalorder %s47, 0
      %p163 = por %p161, %p162
      %s165 = sadd.s32 %s164, 1
      %p168 = scmp.eq.s32.totalorder %s41, 1
      %p169 = scmp.ne.s32.totalorder %s164, %s166
      %p170 = scmp.eq.s32.totalorder %s41, 0
      %p171 = por %p169, %p170
      %p172 = scmp.ne.s32.totalorder %s164, %s166
      %p173 = scmp.eq.s32.totalorder %s46, 1
      %p174 = por %p172, %p173
      %p175 = scmp.ne.s32.totalorder %s166, %s167
      %p176 = scmp.eq.s32.totalorder %s46, 0
      %p177 = por %p175, %p176
      %p178 = scmp.ne.s32.totalorder %s166, %s167
      %p179 = scmp.eq.s32.totalorder %s47, 1
      %p180 = por %p178, %p179
      %p182 = scmp.ne.s32.totalorder %s167, %s181
      %p183 = scmp.eq.s32.totalorder %s47, 0
      %p184 = por %p182, %p183
      %s186 = sadd.s32 %s185, 1
      %p189 = scmp.eq.s32.totalorder %s41, 1
      %p190 = scmp.ne.s32.totalorder %s185, %s187
      %p191 = scmp.eq.s32.totalorder %s41, 0
      %p192 = por %p190, %p191
      %p193 = scmp.ne.s32.totalorder %s185, %s187
      %p194 = scmp.eq.s32.totalorder %s46, 1
      %p195 = por %p193, %p194
      %p196 = scmp.ne.s32.totalorder %s187, %s188
      %p197 = scmp.eq.s32.totalorder %s46, 0
      %p198 = por %p196, %p197
      %p199 = scmp.ne.s32.totalorder %s187, %s188
      %p200 = scmp.eq.s32.totalorder %s47, 1
      %p201 = por %p199, %p200
      %p203 = scmp.ne.s32.totalorder %s188, %s202
      %p204 = scmp.eq.s32.totalorder %s47, 0
      %p205 = por %p203, %p204
      %s207 = sadd.s32 %s206, 1
      %p210 = scmp.eq.s32.totalorder %s41, 1
      %p211 = scmp.ne.s32.totalorder %s206, %s208
      %p212 = scmp.eq.s32.totalorder %s41, 0
      %p213 = por %p211, %p212
      %p214 = scmp.ne.s32.totalorder %s206, %s208
      %p215 = scmp.eq.s32.totalorder %s46, 1
      %p216 = por %p214, %p215
      %p217 = scmp.ne.s32.totalorder %s208, %s209
      %p218 = scmp.eq.s32.totalorder %s46, 0
      %p219 = por %p217, %p218
      %p220 = scmp.ne.s32.totalorder %s208, %s209
      %p221 = scmp.eq.s32.totalorder %s47, 1
      %p222 = por %p220, %p221
      %p224 = scmp.ne.s32.totalorder %s209, %s223
      %p225 = scmp.eq.s32.totalorder %s47, 0
      %p226 = por %p224, %p225
      %s228 = sadd.s32 %s227, 1
      %p231 = scmp.eq.s32.totalorder %s41, 1
      %p232 = scmp.ne.s32.totalorder %s227, %s229
      %p233 = scmp.eq.s32.totalorder %s41, 0
      %p234 = por %p232, %p233
      %p235 = scmp.ne.s32.totalorder %s227, %s229
      %p236 = scmp.eq.s32.totalorder %s46, 1
      %p237 = por %p235, %p236
      %p238 = scmp.ne.s32.totalorder %s229, %s230
      %p239 = scmp.eq.s32.totalorder %s46, 0
      %p240 = por %p238, %p239
      %p241 = scmp.ne.s32.totalorder %s229, %s230
      %p242 = scmp.eq.s32.totalorder %s47, 1
      %p243 = por %p241, %p242
      %p245 = scmp.ne.s32.totalorder %s230, %s244
      %p246 = scmp.eq.s32.totalorder %s47, 0
      %p247 = por %p245, %p246
      %s249 = sadd.s32 %s248, 1
      %p252 = scmp.eq.s32.totalorder %s41, 1
      %p253 = scmp.ne.s32.totalorder %s248, %s250
      %p254 = scmp.eq.s32.totalorder %s41, 0
      %p255 = por %p253, %p254
      %p256 = scmp.ne.s32.totalorder %s248, %s250
      %p257 = scmp.eq.s32.totalorder %s46, 1
      %p258 = por %p256, %p257
      %p259 = scmp.ne.s32.totalorder %s250, %s251
      %p260 = scmp.eq.s32.totalorder %s46, 0
      %p261 = por %p259, %p260
      %p262 = scmp.ne.s32.totalorder %s250, %s251
      %p263 = scmp.eq.s32.totalorder %s47, 1
      %p264 = por %p262, %p263
      %p266 = scmp.ne.s32.totalorder %s251, %s265
      %p267 = scmp.eq.s32.totalorder %s47, 0
      %p268 = por %p266, %p267
      %s270 = sadd.s32 %s269, 1
      %p273 = scmp.eq.s32.totalorder %s41, 1
      %p274 = scmp.ne.s32.totalorder %s269, %s271
      %p275 = scmp.eq.s32.totalorder %s41, 0
      %p276 = por %p274, %p275
      %p277 = scmp.ne.s32.totalorder %s269, %s271
      %p278 = scmp.eq.s32.totalorder %s46, 1
      %p279 = por %p277, %p278
      %p280 = scmp.ne.s32.totalorder %s271, %s272
      %p281 = scmp.eq.s32.totalorder %s46, 0
      %p282 = por %p280, %p281
      %p283 = scmp.ne.s32.totalorder %s271, %s272
      %p284 = scmp.eq.s32.totalorder %s47, 1
      %p285 = por %p283, %p284
      %p287 = scmp.ne.s32.totalorder %s272, %s286
      %p288 = scmp.eq.s32.totalorder %s47, 0
      %p289 = por %p287, %p288
      %s291 = sadd.s32 %s290, 1
      %p294 = scmp.eq.s32.totalorder %s41, 1
      %p295 = scmp.ne.s32.totalorder %s290, %s292
      %p296 = scmp.eq.s32.totalorder %s41, 0
      %p297 = por %p295, %p296
      %p298 = scmp.ne.s32.totalorder %s290, %s292
      %p299 = scmp.eq.s32.totalorder %s46, 1
      %p300 = por %p298, %p299
      %p301 = scmp.ne.s32.totalorder %s292, %s293
      %p302 = scmp.eq.s32.totalorder %s46, 0
      %p303 = por %p301, %p302
      %p304 = scmp.ne.s32.totalorder %s292, %s293
      %p305 = scmp.eq.s32.totalorder %s47, 1
      %p306 = por %p304, %p305
      %p308 = scmp.ne.s32.totalorder %s293, %s307
      %p309 = scmp.eq.s32.totalorder %s47, 0
      %p310 = por %p308, %p309
      %s312 = sadd.s32 %s311, 1
      %p315 = scmp.eq.s32.totalorder %s41, 1
      %p316 = scmp.ne.s32.totalorder %s311, %s313
      %p317 = scmp.eq.s32.totalorder %s41, 0
      %p318 = por %p316, %p317
      %p319 = scmp.ne.s32.totalorder %s311, %s313
      %p320 = scmp.eq.s32.totalorder %s46, 1
      %p321 = por %p319, %p320
      %p322 = scmp.ne.s32.totalorder %s313, %s314
      %p323 = scmp.eq.s32.totalorder %s46, 0
      %p324 = por %p322, %p323
      %p325 = scmp.ne.s32.totalorder %s313, %s314
      %p326 = scmp.eq.s32.totalorder %s47, 1
      %p327 = por %p325, %p326
      %p329 = scmp.ne.s32.totalorder %s314, %s328
      %p330 = scmp.eq.s32.totalorder %s47, 0
      %p331 = por %p329, %p330
      %s333 = sadd.s32 %s332, 1
      %p336 = scmp.eq.s32.totalorder %s41, 1
      %p337 = scmp.ne.s32.totalorder %s332, %s334
      %p338 = scmp.eq.s32.totalorder %s41, 0
      %p339 = por %p337, %p338
      %p340 = scmp.ne.s32.totalorder %s332, %s334
      %p341 = scmp.eq.s32.totalorder %s46, 1
      %p342 = por %p340, %p341
      %p343 = scmp.ne.s32.totalorder %s334, %s335
      %p344 = scmp.eq.s32.totalorder %s46, 0
      %p345 = por %p343, %p344
      %p346 = scmp.ne.s32.totalorder %s334, %s335
      %p347 = scmp.eq.s32.totalorder %s47, 1
      %p348 = por %p346, %p347
      %p350 = scmp.ne.s32.totalorder %s335, %s349
      %p351 = scmp.eq.s32.totalorder %s47, 0
      %p352 = por %p350, %p351
      %s354 = sadd.s32 %s353, 1
      %p357 = scmp.eq.s32.totalorder %s41, 1
      %p358 = scmp.ne.s32.totalorder %s353, %s355
      %p359 = scmp.eq.s32.totalorder %s41, 0
      %p360 = por %p358, %p359
      %p361 = scmp.ne.s32.totalorder %s353, %s355
      %p362 = scmp.eq.s32.totalorder %s46, 1
      %p363 = por %p361, %p362
      %p364 = scmp.ne.s32.totalorder %s355, %s356
      %p365 = scmp.eq.s32.totalorder %s46, 0
      %p366 = por %p364, %p365
      %p367 = scmp.ne.s32.totalorder %s355, %s356
      %p368 = scmp.eq.s32.totalorder %s47, 1
      %p369 = por %p367, %p368
      %p371 = scmp.ne.s32.totalorder %s356, %s370
      %p372 = scmp.eq.s32.totalorder %s47, 0
      %p373 = por %p371, %p372
      %s375 = sadd.s32 %s374, 1
      %p378 = scmp.eq.s32.totalorder %s41, 1
      %p379 = scmp.ne.s32.totalorder %s374, %s376
      %p380 = scmp.eq.s32.totalorder %s41, 0
      %p381 = por %p379, %p380
      %p382 = scmp.ne.s32.totalorder %s374, %s376
      %p383 = scmp.eq.s32.totalorder %s46, 1
      %p384 = por %p382, %p383
      %p385 = scmp.ne.s32.totalorder %s376, %s377
      %p386 = scmp.eq.s32.totalorder %s46, 0
      %p387 = por %p385, %p386
      %p388 = scmp.ne.s32.totalorder %s376, %s377
      %p389 = scmp.eq.s32.totalorder %s47, 1
      %p390 = por %p388, %p389
      %p392 = scmp.ne.s32.totalorder %s377, %s391
      %p393 = scmp.eq.s32.totalorder %s47, 0
      %p394 = por %p392, %p393
      %s396 = sadd.s32 %s395, 1
      %p399 = scmp.eq.s32.totalorder %s41, 1
      %p400 = scmp.ne.s32.totalorder %s395, %s397
      %p401 = scmp.eq.s32.totalorder %s41, 0
      %p402 = por %p400, %p401
      %p403 = scmp.ne.s32.totalorder %s395, %s397
      %p404 = scmp.eq.s32.totalorder %s46, 1
      %p405 = por %p403, %p404
      %p406 = scmp.ne.s32.totalorder %s397, %s398
      %p407 = scmp.eq.s32.totalorder %s46, 0
      %p408 = por %p406, %p407
      %p409 = scmp.ne.s32.totalorder %s397, %s398
      %p410 = scmp.eq.s32.totalorder %s47, 1
      %p411 = por %p409, %p410
      %p413 = scmp.ne.s32.totalorder %s398, %s412
      %p414 = scmp.eq.s32.totalorder %s47, 0
      %p415 = por %p413, %p414
      %s417 = sadd.s32 %s416, 1
      %p420 = scmp.eq.s32.totalorder %s41, 1
      %p421 = scmp.ne.s32.totalorder %s416, %s418
      %p422 = scmp.eq.s32.totalorder %s41, 0
      %p423 = por %p421, %p422
      %p424 = scmp.ne.s32.totalorder %s416, %s418
      %p425 = scmp.eq.s32.totalorder %s46, 1
      %p426 = por %p424, %p425
      %p427 = scmp.ne.s32.totalorder %s418, %s419
      %p428 = scmp.eq.s32.totalorder %s46, 0
      %p429 = por %p427, %p428
      %p430 = scmp.ne.s32.totalorder %s418, %s419
      %p431 = scmp.eq.s32.totalorder %s47, 1
      %p432 = por %p430, %p431
      %p434 = scmp.ne.s32.totalorder %s419, %s433
      %p435 = scmp.eq.s32.totalorder %s47, 0
      %p436 = por %p434, %p435
      %s437 = ssub.s32 %s41, %s48
      %p438 = scmp.eq.s32.totalorder %s437, 0
      %s440 = sadd.s32 %s439, 1
      %s441 = scalar_select %p438, %s439, %s440
      %p444 = pneg %p438
      %p445 = scmp.eq.s32.totalorder %s41, 1
      %p446 = por %p444, %p445
      %p447 = scmp.ne.s32.totalorder %s439, %s442
      %p448 = scmp.eq.s32.totalorder %s41, 0
      %p449 = por %p447, %p448
      %p450 = scmp.ne.s32.totalorder %s439, %s442
      %p451 = scmp.eq.s32.totalorder %s46, 1
      %p452 = por %p450, %p451
      %p453 = scmp.ne.s32.totalorder %s442, %s443
      %p454 = scmp.eq.s32.totalorder %s46, 0
      %p455 = por %p453, %p454
      %p456 = scmp.ne.s32.totalorder %s442, %s443
      %p457 = scmp.eq.s32.totalorder %s47, 1
      %p458 = por %p456, %p457
      %p460 = scmp.ne.s32.totalorder %s443, %s459
      %p461 = scmp.eq.s32.totalorder %s47, 0
      %p462 = por %p460, %p461
      %p463 = scmp.le.s32.totalorder 1, %s41
      %p464 = scmp.lt.s32.totalorder %s41, 3
      %p465 = pnand %p463, %p464
      %p466 = pneg %p465
      // Predicated region
      $region9: #{tpu_custom_call.1} parent=5 // pred_check
        _
      $region10: #{tpu_custom_call.1} parent=5 // pred_check_branch
        %468 = sbr.rel (%p465) target = $region12
      $region11: #{tpu_custom_call.1} parent=5 // pred_region
        %s469 = ssub.s32 %s41, 1
        // Predicated region
        $region13: #{tpu_custom_call.1} parent=11 // pred_check
          %p470 = pneg %p114
        $region14: #{tpu_custom_call.1} parent=11 // pred_check_branch
          %472 = sbr.rel (%p470) target = $region16
        $region15: #{tpu_custom_call.1} parent=11 // pred_region
          %s474 = ssub.s32 256, 256
          %475 = vsyncadd [#allocation6], %s474
          %s476 = sshll.u32 [#allocation7], 4
          %s477 = int_to_ptr.vmem [resolvable:$true] %s476
          %482 = dma.hbm_to_vmem [thread:$0]  %s2, 256, %s477, [#allocation6], 64, 64, 4
        $region16: #{tpu_custom_call.1} parent=11 // pred_fallthru
          _
        // Predicated region
        $region17: #{tpu_custom_call.1} parent=11 // pred_check
          %p483 = pneg %p135
        $region18: #{tpu_custom_call.1} parent=11 // pred_check_branch
          %485 = sbr.rel (%p483) target = $region20
        $region19: #{tpu_custom_call.1} parent=11 // pred_region
          %s487 = ssub.s32 256, 256
          %488 = vsyncadd [#allocation9], %s487
          %s489 = sshll.u32 [#allocation8], 4
          %s490 = int_to_ptr.vmem [resolvable:$true] %s489
          %495 = dma.hbm_to_vmem [thread:$0]  %s3, 256, %s490, [#allocation9], 64, 64, 4
        $region20: #{tpu_custom_call.1} parent=11 // pred_fallthru
          _
        // Predicated region
        $region21: #{tpu_custom_call.1} parent=11 // pred_check
          %p496 = pneg %p156
        $region22: #{tpu_custom_call.1} parent=11 // pred_check_branch
          %498 = sbr.rel (%p496) target = $region24
        $region23: #{tpu_custom_call.1} parent=11 // pred_region
          %s500 = ssub.s32 256, 256
          %501 = vsyncadd [#allocation9], %s500
          %s502 = sshll.u32 [#allocation10], 4
          %s503 = int_to_ptr.vmem [resolvable:$true] %s502
          %508 = dma.hbm_to_vmem [thread:$0]  %s4, 256, %s503, [#allocation9], 64, 64, 4
        $region24: #{tpu_custom_call.1} parent=11 // pred_fallthru
          _
        // Predicated region
        $region25: #{tpu_custom_call.1} parent=11 // pred_check
          %p509 = pneg %p177
        $region26: #{tpu_custom_call.1} parent=11 // pred_check_branch
          %511 = sbr.rel (%p509) target = $region28
        $region27: #{tpu_custom_call.1} parent=11 // pred_region
          %s513 = ssub.s32 16, 16
          %514 = vsyncadd [#allocation12], %s513
          %s516 = sshll.u32 [#allocation11], 4
          %s517 = int_to_ptr.vmem [resolvable:$true] %s516
          %519 = dma.hbm_to_vmem [thread:$0]  %s5, 16, %s517, [#allocation12]
        $region28: #{tpu_custom_call.1} parent=11 // pred_fallthru
          _
        // Predicated region
        $region29: #{tpu_custom_call.1} parent=11 // pred_check
          %p520 = pneg %p198
        $region30: #{tpu_custom_call.1} parent=11 // pred_check_branch
          %522 = sbr.rel (%p520) target = $region32
        $region31: #{tpu_custom_call.1} parent=11 // pred_region
          %s524 = ssub.s32 16, 16
          %525 = vsyncadd [#allocation12], %s524
          %s527 = sshll.u32 [#allocation13], 4
          %s528 = int_to_ptr.vmem [resolvable:$true] %s527
          %530 = dma.hbm_to_vmem [thread:$0]  %s6, 16, %s528, [#allocation12]
        $region32: #{tpu_custom_call.1} parent=11 // pred_fallthru
          _
        // Predicated region
        $region33: #{tpu_custom_call.1} parent=11 // pred_check
          %p531 = pneg %p219
        $region34: #{tpu_custom_call.1} parent=11 // pred_check_branch
          %533 = sbr.rel (%p531) target = $region36
        $region35: #{tpu_custom_call.1} parent=11 // pred_region
          %s535 = ssub.s32 16, 16
          %536 = vsyncadd [#allocation15], %s535
          %s538 = sshll.u32 [#allocation14], 4
          %s539 = int_to_ptr.vmem [resolvable:$true] %s538
          %541 = dma.hbm_to_vmem [thread:$0]  %s7, 16, %s539, [#allocation15]
        $region36: #{tpu_custom_call.1} parent=11 // pred_fallthru
          _
        // Predicated region
        $region37: #{tpu_custom_call.1} parent=11 // pred_check
          %p542 = pneg %p240
        $region38: #{tpu_custom_call.1} parent=11 // pred_check_branch
          %544 = sbr.rel (%p542) target = $region40
        $region39: #{tpu_custom_call.1} parent=11 // pred_region
          %s546 = ssub.s32 256, 256
          %547 = vsyncadd [#allocation15], %s546
          %s548 = sshll.u32 [#allocation16], 4
          %s549 = int_to_ptr.vmem [resolvable:$true] %s548
          %554 = dma.hbm_to_vmem [thread:$0]  %s8, 256, %s549, [#allocation15], 64, 64, 4
        $region40: #{tpu_custom_call.1} parent=11 // pred_fallthru
          _
        // Predicated region
        $region41: #{tpu_custom_call.1} parent=11 // pred_check
          %p555 = pneg %p261
        $region42: #{tpu_custom_call.1} parent=11 // pred_check_branch
          %557 = sbr.rel (%p555) target = $region44
        $region43: #{tpu_custom_call.1} parent=11 // pred_region
          %s559 = ssub.s32 16, 16
          %560 = vsyncadd [#allocation18], %s559
          %s562 = sshll.u32 [#allocation17], 4
          %s563 = int_to_ptr.vmem [resolvable:$true] %s562
          %565 = dma.hbm_to_vmem [thread:$0]  %s9, 16, %s563, [#allocation18]
        $region44: #{tpu_custom_call.1} parent=11 // pred_fallthru
          _
        // Predicated region
        $region45: #{tpu_custom_call.1} parent=11 // pred_check
          %p566 = pneg %p282
        $region46: #{tpu_custom_call.1} parent=11 // pred_check_branch
          %568 = sbr.rel (%p566) target = $region48
        $region47: #{tpu_custom_call.1} parent=11 // pred_region
          %s570 = ssub.s32 16, 16
          %571 = vsyncadd [#allocation18], %s570
          %s573 = sshll.u32 [#allocation19], 4
          %s574 = int_to_ptr.vmem [resolvable:$true] %s573
          %576 = dma.hbm_to_vmem [thread:$0]  %s10, 16, %s574, [#allocation18]
        $region48: #{tpu_custom_call.1} parent=11 // pred_fallthru
          _
        // Predicated region
        $region49: #{tpu_custom_call.1} parent=11 // pred_check
          %p577 = pneg %p303
        $region50: #{tpu_custom_call.1} parent=11 // pred_check_branch
          %579 = sbr.rel (%p577) target = $region52
        $region51: #{tpu_custom_call.1} parent=11 // pred_region
          %s581 = ssub.s32 16, 16
          %582 = vsyncadd [#allocation21], %s581
          %s584 = sshll.u32 [#allocation20], 4
          %s585 = int_to_ptr.vmem [resolvable:$true] %s584
          %587 = dma.hbm_to_vmem [thread:$0]  %s11, 16, %s585, [#allocation21]
        $region52: #{tpu_custom_call.1} parent=11 // pred_fallthru
          _
        // Predicated region
        $region53: #{tpu_custom_call.1} parent=11 // pred_check
          %p588 = pneg %p324
        $region54: #{tpu_custom_call.1} parent=11 // pred_check_branch
          %590 = sbr.rel (%p588) target = $region56
        $region55: #{tpu_custom_call.1} parent=11 // pred_region
          %s592 = ssub.s32 256, 256
          %593 = vsyncadd [#allocation21], %s592
          %s594 = sshll.u32 [#allocation22], 4
          %s595 = int_to_ptr.vmem [resolvable:$true] %s594
          %600 = dma.hbm_to_vmem [thread:$0]  %s12, 256, %s595, [#allocation21], 64, 64, 4
        $region56: #{tpu_custom_call.1} parent=11 // pred_fallthru
          _
        // Predicated region
        $region57: #{tpu_custom_call.1} parent=11 // pred_check
          %p601 = pneg %p345
        $region58: #{tpu_custom_call.1} parent=11 // pred_check_branch
          %603 = sbr.rel (%p601) target = $region60
        $region59: #{tpu_custom_call.1} parent=11 // pred_region
          %s605 = ssub.s32 16, 16
          %606 = vsyncadd [#allocation24], %s605
          %s608 = sshll.u32 [#allocation23], 4
          %s609 = int_to_ptr.vmem [resolvable:$true] %s608
          %611 = dma.hbm_to_vmem [thread:$0]  %s13, 16, %s609, [#allocation24]
        $region60: #{tpu_custom_call.1} parent=11 // pred_fallthru
          _
        // Predicated region
        $region61: #{tpu_custom_call.1} parent=11 // pred_check
          %p612 = pneg %p366
        $region62: #{tpu_custom_call.1} parent=11 // pred_check_branch
          %614 = sbr.rel (%p612) target = $region64
        $region63: #{tpu_custom_call.1} parent=11 // pred_region
          %s616 = ssub.s32 512, 512
          %617 = vsyncadd [#allocation24], %s616
          %s618 = sshll.u32 [#allocation25], 4
          %s619 = int_to_ptr.vmem [resolvable:$true] %s618
          %624 = dma.hbm_to_vmem [thread:$0]  %s14, 512, %s619, [#allocation24], 64, 64, 4
        $region64: #{tpu_custom_call.1} parent=11 // pred_fallthru
          _
        // Predicated region
        $region65: #{tpu_custom_call.1} parent=11 // pred_check
          %p625 = pneg %p387
        $region66: #{tpu_custom_call.1} parent=11 // pred_check_branch
          %627 = sbr.rel (%p625) target = $region68
        $region67: #{tpu_custom_call.1} parent=11 // pred_region
          %s629 = ssub.s32 16, 16
          %630 = vsyncadd [#allocation27], %s629
          %s632 = sshll.u32 [#allocation26], 4
          %s633 = int_to_ptr.vmem [resolvable:$true] %s632
          %635 = dma.hbm_to_vmem [thread:$0]  %s15, 16, %s633, [#allocation27]
        $region68: #{tpu_custom_call.1} parent=11 // pred_fallthru
          _
        // Predicated region
        $region69: #{tpu_custom_call.1} parent=11 // pred_check
          %p636 = pneg %p408
        $region70: #{tpu_custom_call.1} parent=11 // pred_check_branch
          %638 = sbr.rel (%p636) target = $region72
        $region71: #{tpu_custom_call.1} parent=11 // pred_region
          %s640 = ssub.s32 16, 16
          %641 = vsyncadd [#allocation27], %s640
          %s643 = sshll.u32 [#allocation28], 4
          %s644 = int_to_ptr.vmem [resolvable:$true] %s643
          %646 = dma.hbm_to_vmem [thread:$0]  %s16, 16, %s644, [#allocation27]
        $region72: #{tpu_custom_call.1} parent=11 // pred_fallthru
          _
        // Predicated region
        $region73: #{tpu_custom_call.1} parent=11 // pred_check
          %p647 = pneg %p429
        $region74: #{tpu_custom_call.1} parent=11 // pred_check_branch
          %649 = sbr.rel (%p647) target = $region76
        $region75: #{tpu_custom_call.1} parent=11 // pred_region
          %s651 = ssub.s32 16, 16
          %652 = vsyncadd [#allocation30], %s651
          %s654 = sshll.u32 [#allocation29], 4
          %s655 = int_to_ptr.vmem [resolvable:$true] %s654
          %657 = dma.hbm_to_vmem [thread:$0]  %s17, 16, %s655, [#allocation30]
        $region76: #{tpu_custom_call.1} parent=11 // pred_fallthru
          _
      $region12: #{tpu_custom_call.1} parent=5 // pred_fallthru
        _
      %p658 = scmp.lt.s32.totalorder %s41, 2
      // Predicated region
      $region77: #{tpu_custom_call.1} parent=5 // pred_check
        %p659 = pneg %p658
      $region78: #{tpu_custom_call.1} parent=5 // pred_check_branch
        %661 = sbr.rel (%p659) target = $region80
      $region79: #{tpu_custom_call.1} parent=5 // pred_region
        // Predicated region
        $region81: #{tpu_custom_call.1} parent=79 // pred_check
          %p662 = pneg %p61
        $region82: #{tpu_custom_call.1} parent=79 // pred_check_branch
          %664 = sbr.rel (%p662) target = $region84
        $region83: #{tpu_custom_call.1} parent=79 // pred_region
          %s665 = sand.u32 %s51, 1
          %s666 = scalar_lea.sflag [#allocation3], %s665
          %s667 = sand.u32 %s51, 1
          %s668 = smul.addr %s667, 8
          %s669 = scalar_lea.vmem [#allocation2], %s668
          %s671 = ssub.s32 128, 128
          %672 = vsyncadd %s666, %s671
          %s673 = smul.addr %s41, 128
          %s674 = scalar_lea.hbm %s0, %s673
          %s676 = sshll.u32 %s669, 4
          %s677 = int_to_ptr.vmem [resolvable:$true] %s676
          %679 = dma.hbm_to_vmem [thread:$0]  %s674, 128, %s677, %s666
        $region84: #{tpu_custom_call.1} parent=79 // pred_fallthru
          _
        // Predicated region
        $region85: #{tpu_custom_call.1} parent=79 // pred_check
          %p680 = pneg %p87
        $region86: #{tpu_custom_call.1} parent=79 // pred_check_branch
          %682 = sbr.rel (%p680) target = $region88
        $region87: #{tpu_custom_call.1} parent=79 // pred_region
          %s683 = sand.u32 %s41, 1
          %s684 = scalar_lea.sflag [#allocation6], %s683
          %s685 = sand.u32 %s77, 1
          %s686 = scalar_lea.vmem [#allocation5], %s685
          %s688 = ssub.s32 16, 16
          %689 = vsyncadd %s684, %s688
          %s690 = smul.addr %s41, 16
          %s691 = scalar_lea.hbm %s1, %s690
          %s693 = sshll.u32 %s686, 4
          %s694 = int_to_ptr.vmem [resolvable:$true] %s693
          %696 = dma.hbm_to_vmem [thread:$0]  %s691, 16, %s694, %s684
        $region88: #{tpu_custom_call.1} parent=79 // pred_fallthru
          _
      $region80: #{tpu_custom_call.1} parent=5 // pred_fallthru
        _
      %p697 = scmp.le.s32.totalorder 1, %s41
      %p698 = scmp.lt.s32.totalorder %s41, 3
      %p699 = pnand %p697, %p698
      %p700 = pneg %p699
      // Predicated region
      $region89: #{tpu_custom_call.1} parent=5 // pred_check
        _
      $region90: #{tpu_custom_call.1} parent=5 // pred_check_branch
        %702 = sbr.rel (%p699) target = $region92
      $region91: #{tpu_custom_call.1} parent=5 // pred_region
        %s703 = ssub.s32 %s41, 1
        %s704 = sand.u32 %s54, 1
        %s705 = scalar_lea.sflag [#allocation3], %s704
        %s706 = sand.u32 %s54, 1
        %s707 = smul.addr %s706, 8
        %s708 = scalar_lea.vmem [#allocation2], %s707
        // Predicated region
        $region93: #{tpu_custom_call.1} parent=91 // pred_check
          %p709 = pneg %p67
        $region94: #{tpu_custom_call.1} parent=91 // pred_check_branch
          %711 = sbr.rel (%p709) target = $region96
        $region95: #{tpu_custom_call.1} parent=91 // pred_region
          %712 = dma.done %s705, 128
        $region96: #{tpu_custom_call.1} parent=91 // pred_fallthru
          _
        %s713 = sand.u32 %s46, 1
        %s714 = scalar_lea.sflag [#allocation6], %s713
        %s715 = sand.u32 %s80, 1
        %s716 = scalar_lea.vmem [#allocation5], %s715
        // Predicated region
        $region97: #{tpu_custom_call.1} parent=91 // pred_check
          %p717 = pneg %p93
        $region98: #{tpu_custom_call.1} parent=91 // pred_check_branch
          %719 = sbr.rel (%p717) target = $region100
        $region99: #{tpu_custom_call.1} parent=91 // pred_region
          %720 = dma.done %s714, 16
        $region100: #{tpu_custom_call.1} parent=91 // pred_fallthru
          _
        // Predicated region
        $region101: #{tpu_custom_call.1} parent=91 // pred_check
          %p721 = pneg %p114
        $region102: #{tpu_custom_call.1} parent=91 // pred_check_branch
          %723 = sbr.rel (%p721) target = $region104
        $region103: #{tpu_custom_call.1} parent=91 // pred_region
          %724 = dma.done [#allocation6], 256
        $region104: #{tpu_custom_call.1} parent=91 // pred_fallthru
          _
        // Predicated region
        $region105: #{tpu_custom_call.1} parent=91 // pred_check
          %p725 = pneg %p135
        $region106: #{tpu_custom_call.1} parent=91 // pred_check_branch
          %727 = sbr.rel (%p725) target = $region108
        $region107: #{tpu_custom_call.1} parent=91 // pred_region
          %728 = dma.done [#allocation9], 256
        $region108: #{tpu_custom_call.1} parent=91 // pred_fallthru
          _
        // Predicated region
        $region109: #{tpu_custom_call.1} parent=91 // pred_check
          %p729 = pneg %p156
        $region110: #{tpu_custom_call.1} parent=91 // pred_check_branch
          %731 = sbr.rel (%p729) target = $region112
        $region111: #{tpu_custom_call.1} parent=91 // pred_region
          %732 = dma.done [#allocation9], 256
        $region112: #{tpu_custom_call.1} parent=91 // pred_fallthru
          _
        // Predicated region
        $region113: #{tpu_custom_call.1} parent=91 // pred_check
          %p733 = pneg %p177
        $region114: #{tpu_custom_call.1} parent=91 // pred_check_branch
          %735 = sbr.rel (%p733) target = $region116
        $region115: #{tpu_custom_call.1} parent=91 // pred_region
          %736 = dma.done [#allocation12], 16
        $region116: #{tpu_custom_call.1} parent=91 // pred_fallthru
          _
        // Predicated region
        $region117: #{tpu_custom_call.1} parent=91 // pred_check
          %p737 = pneg %p198
        $region118: #{tpu_custom_call.1} parent=91 // pred_check_branch
          %739 = sbr.rel (%p737) target = $region120
        $region119: #{tpu_custom_call.1} parent=91 // pred_region
          %740 = dma.done [#allocation12], 16
        $region120: #{tpu_custom_call.1} parent=91 // pred_fallthru
          _
        // Predicated region
        $region121: #{tpu_custom_call.1} parent=91 // pred_check
          %p741 = pneg %p219
        $region122: #{tpu_custom_call.1} parent=91 // pred_check_branch
          %743 = sbr.rel (%p741) target = $region124
        $region123: #{tpu_custom_call.1} parent=91 // pred_region
          %744 = dma.done [#allocation15], 16
        $region124: #{tpu_custom_call.1} parent=91 // pred_fallthru
          _
        // Predicated region
        $region125: #{tpu_custom_call.1} parent=91 // pred_check
          %p745 = pneg %p240
        $region126: #{tpu_custom_call.1} parent=91 // pred_check_branch
          %747 = sbr.rel (%p745) target = $region128
        $region127: #{tpu_custom_call.1} parent=91 // pred_region
          %748 = dma.done [#allocation15], 256
        $region128: #{tpu_custom_call.1} parent=91 // pred_fallthru
          _
        // Predicated region
        $region129: #{tpu_custom_call.1} parent=91 // pred_check
          %p749 = pneg %p261
        $region130: #{tpu_custom_call.1} parent=91 // pred_check_branch
          %751 = sbr.rel (%p749) target = $region132
        $region131: #{tpu_custom_call.1} parent=91 // pred_region
          %752 = dma.done [#allocation18], 16
        $region132: #{tpu_custom_call.1} parent=91 // pred_fallthru
          _
        // Predicated region
        $region133: #{tpu_custom_call.1} parent=91 // pred_check
          %p753 = pneg %p282
        $region134: #{tpu_custom_call.1} parent=91 // pred_check_branch
          %755 = sbr.rel (%p753) target = $region136
        $region135: #{tpu_custom_call.1} parent=91 // pred_region
          %756 = dma.done [#allocation18], 16
        $region136: #{tpu_custom_call.1} parent=91 // pred_fallthru
          _
        // Predicated region
        $region137: #{tpu_custom_call.1} parent=91 // pred_check
          %p757 = pneg %p303
        $region138: #{tpu_custom_call.1} parent=91 // pred_check_branch
          %759 = sbr.rel (%p757) target = $region140
        $region139: #{tpu_custom_call.1} parent=91 // pred_region
          %760 = dma.done [#allocation21], 16
        $region140: #{tpu_custom_call.1} parent=91 // pred_fallthru
          _
        // Predicated region
        $region141: #{tpu_custom_call.1} parent=91 // pred_check
          %p761 = pneg %p324
        $region142: #{tpu_custom_call.1} parent=91 // pred_check_branch
          %763 = sbr.rel (%p761) target = $region144
        $region143: #{tpu_custom_call.1} parent=91 // pred_region
          %764 = dma.done [#allocation21], 256
        $region144: #{tpu_custom_call.1} parent=91 // pred_fallthru
          _
        // Predicated region
        $region145: #{tpu_custom_call.1} parent=91 // pred_check
          %p765 = pneg %p345
        $region146: #{tpu_custom_call.1} parent=91 // pred_check_branch
          %767 = sbr.rel (%p765) target = $region148
        $region147: #{tpu_custom_call.1} parent=91 // pred_region
          %768 = dma.done [#allocation24], 16
        $region148: #{tpu_custom_call.1} parent=91 // pred_fallthru
          _
        // Predicated region
        $region149: #{tpu_custom_call.1} parent=91 // pred_check
          %p769 = pneg %p366
        $region150: #{tpu_custom_call.1} parent=91 // pred_check_branch
          %771 = sbr.rel (%p769) target = $region152
        $region151: #{tpu_custom_call.1} parent=91 // pred_region
          %772 = dma.done [#allocation24], 512
        $region152: #{tpu_custom_call.1} parent=91 // pred_fallthru
          _
        // Predicated region
        $region153: #{tpu_custom_call.1} parent=91 // pred_check
          %p773 = pneg %p387
        $region154: #{tpu_custom_call.1} parent=91 // pred_check_branch
          %775 = sbr.rel (%p773) target = $region156
        $region155: #{tpu_custom_call.1} parent=91 // pred_region
          %776 = dma.done [#allocation27], 16
        $region156: #{tpu_custom_call.1} parent=91 // pred_fallthru
          _
        // Predicated region
        $region157: #{tpu_custom_call.1} parent=91 // pred_check
          %p777 = pneg %p408
        $region158: #{tpu_custom_call.1} parent=91 // pred_check_branch
          %779 = sbr.rel (%p777) target = $region160
        $region159: #{tpu_custom_call.1} parent=91 // pred_region
          %780 = dma.done [#allocation27], 16
        $region160: #{tpu_custom_call.1} parent=91 // pred_fallthru
          _
        // Predicated region
        $region161: #{tpu_custom_call.1} parent=91 // pred_check
          %p781 = pneg %p429
        $region162: #{tpu_custom_call.1} parent=91 // pred_check_branch
          %783 = sbr.rel (%p781) target = $region164
        $region163: #{tpu_custom_call.1} parent=91 // pred_region
          %784 = dma.done [#allocation30], 16
        $region164: #{tpu_custom_call.1} parent=91 // pred_fallthru
          _
        %s785 = sand.u32 %s54, 1
        %s786 = scalar_lea.sflag [#allocation3], %s785
        %s787 = sand.u32 %s54, 1
        %s788 = smul.addr %s787, 8
        %s789 = scalar_lea.vmem [#allocation2], %s788
        %p790 = pneg %p67
        %p791 = pneg %p64
        %s792 = sand.u32 %s46, 1
        %s793 = scalar_lea.sflag [#allocation6], %s792
        %s794 = sand.u32 %s80, 1
        %s795 = scalar_lea.vmem [#allocation5], %s794
        %p796 = pneg %p93
        %p797 = pneg %p90
        %p798 = pneg %p114
        %p799 = pneg %p111
        %p800 = pneg %p135
        %p801 = pneg %p132
        %p802 = pneg %p156
        %p803 = pneg %p153
        %p804 = pneg %p177
        %p805 = pneg %p174
        %p806 = pneg %p198
        %p807 = pneg %p195
        %p808 = pneg %p219
        %p809 = pneg %p216
        %p810 = pneg %p240
        %p811 = pneg %p237
        %p812 = pneg %p261
        %p813 = pneg %p258
        %p814 = pneg %p282
        %p815 = pneg %p279
        %p816 = pneg %p303
        %p817 = pneg %p300
        %p818 = pneg %p324
        %p819 = pneg %p321
        %p820 = pneg %p345
        %p821 = pneg %p342
        %p822 = pneg %p366
        %p823 = pneg %p363
        %p824 = pneg %p387
        %p825 = pneg %p384
        %p826 = pneg %p408
        %p827 = pneg %p405
        %p828 = pneg %p429
        %p829 = pneg %p426
        %p830 = pneg %p455
        %p831 = pneg %p452
        %s832 = sand.u32 %s442, 1
        %s833 = scalar_lea.sflag [#allocation4], %s832
        %s834 = sand.u32 %s442, 1
        %s835 = smul.addr %s834, 8
        %s836 = scalar_lea.vmem [#allocation31], %s835
        %v838 = vld [vmem:[%s708] sm:$0xff]
        %v839 = vpack.c.bf16 %v838, %v838
        %v840 = vld [vmem:[#allocation7] sm:$0xf]
        %v841 = vld [vmem:[#allocation7 + $0x4] sm:$0xf]
        %v842 = vld [vmem:[#allocation7 + $0x8] sm:$0xf]
        %v843 = vld [vmem:[#allocation7 + $0xc] sm:$0xf]
        %v844 = vld [vmem:[#allocation11] sm:$0x1]
        %v846 = vlaneseq
        %v847 = vshrl.u32 %v846, 7
        %v848 = vsub.s32 0, %v847
        %v849 = vrot.slane %v844, %v848
        %v855 = vunpack.c.l.b16 %v840
        %v856 = vunpack.c.l.b16 %v841
        %v857 = vunpack.c.l.b16 %v842
        %v858 = vunpack.c.l.b16 %v843
        %v859 = vpack.c.b16 %v856, %v855
        %v860 = vpack.c.b16 %v858, %v857
        %vm863 = vcmask 261120
        %v865 = vsel %vm863, %v839, 0
        %867 = vmatprep.subr.bf16.mxu0 0
        %868 = vmatpush1.bf16.msra.mxu0 %v859
        %869 = vmatprep.subr.bf16.mxu0 0
        %870 = vmatpush1.bf16.msra.mxu0 %v860
        %871 = vmatprep.subr.bf16.mxu0 0
        %872 = vmatpush1.bf16.msra.mxu0 0
        %873 = vmatprep.subr.bf16.mxu0 0
        %874 = vmatpush1.bf16.msra.mxu0 0
        %875 = vmatprep.subr.bf16.mxu0 0
        %876 = vmatpush1.bf16.msra.mxu0 0
        %877 = vmatprep.subr.bf16.mxu0 0
        %878 = vmatpush1.bf16.msra.mxu0 0
        %879 = vmatprep.subr.bf16.mxu0 0
        %880 = vmatpush1.bf16.msra.mxu0 0
        %881 = vmatprep.subr.bf16.mxu0 0
        %882 = vmatpush1.bf16.msra.mxu0 0
        %883 = vmatprep.subr.bf16.mxu0 0
        %884 = vmatpush1.bf16.msra.mxu0 0
        %885 = vmatprep.subr.bf16.mxu0 0
        %886 = vmatpush1.bf16.msra.mxu0 0
        %887 = vmatprep.subr.bf16.mxu0 0
        %888 = vmatpush1.bf16.msra.mxu0 0
        %889 = vmatprep.subr.bf16.mxu0 0
        %890 = vmatpush1.bf16.msra.mxu0 0
        %891 = vmatprep.subr.bf16.mxu0 0
        %892 = vmatpush1.bf16.msra.mxu0 0
        %893 = vmatprep.subr.bf16.mxu0 0
        %894 = vmatpush1.bf16.msra.mxu0 0
        %895 = vmatprep.subr.bf16.mxu0 0
        %896 = vmatpush1.bf16.msra.mxu0 0
        %897 = vmatprep.subr.bf16.mxu0 0
        %898 = vmatpush1.bf16.msra.mxu0 0
        %899 = vmatprep.mubr.bf16.mxu0 0
        %900 = vmatmul.mubr.bf16.gmra.mrb[0].mxu0 %v865
        %v901 = vpop.f32.mrb[0].mxu0
        %v902 = vadd.f32 %v849, %v901
        %v903 = vpop.f32.mrb[0].mxu0
        %v904 = vpop.f32.mrb[0].mxu0
        %v905 = vpop.f32.mrb[0].mxu0
        %906 = vdwg.mxu0
        %v907 = vld [vmem:[#allocation8] sm:$0xf]
        %v908 = vld [vmem:[#allocation8 + $0x4] sm:$0xf]
        %v909 = vld [vmem:[#allocation8 + $0x8] sm:$0xf]
        %v910 = vld [vmem:[#allocation8 + $0xc] sm:$0xf]
        %v911 = vld [vmem:[#allocation13] sm:$0x1]
        %v913 = vlaneseq
        %v914 = vshrl.u32 %v913, 7
        %v915 = vsub.s32 0, %v914
        %v916 = vrot.slane %v911, %v915
        %v922 = vunpack.c.l.b16 %v907
        %v923 = vunpack.c.l.b16 %v908
        %v924 = vunpack.c.l.b16 %v909
        %v925 = vunpack.c.l.b16 %v910
        %v926 = vpack.c.b16 %v923, %v922
        %v927 = vpack.c.b16 %v925, %v924
        %930 = vmatprep.subr.bf16.mxu0 0
        %931 = vmatpush1.bf16.msra.mxu0 %v926
        %932 = vmatprep.subr.bf16.mxu0 0
        %933 = vmatpush1.bf16.msra.mxu0 %v927
        %934 = vmatprep.subr.bf16.mxu0 0
        %935 = vmatpush1.bf16.msra.mxu0 0
        %936 = vmatprep.subr.bf16.mxu0 0
        %937 = vmatpush1.bf16.msra.mxu0 0
        %938 = vmatprep.subr.bf16.mxu0 0
        %939 = vmatpush1.bf16.msra.mxu0 0
        %940 = vmatprep.subr.bf16.mxu0 0
        %941 = vmatpush1.bf16.msra.mxu0 0
        %942 = vmatprep.subr.bf16.mxu0 0
        %943 = vmatpush1.bf16.msra.mxu0 0
        %944 = vmatprep.subr.bf16.mxu0 0
        %945 = vmatpush1.bf16.msra.mxu0 0
        %946 = vmatprep.subr.bf16.mxu0 0
        %947 = vmatpush1.bf16.msra.mxu0 0
        %948 = vmatprep.subr.bf16.mxu0 0
        %949 = vmatpush1.bf16.msra.mxu0 0
        %950 = vmatprep.subr.bf16.mxu0 0
        %951 = vmatpush1.bf16.msra.mxu0 0
        %952 = vmatprep.subr.bf16.mxu0 0
        %953 = vmatpush1.bf16.msra.mxu0 0
        %954 = vmatprep.subr.bf16.mxu0 0
        %955 = vmatpush1.bf16.msra.mxu0 0
        %956 = vmatprep.subr.bf16.mxu0 0
        %957 = vmatpush1.bf16.msra.mxu0 0
        %958 = vmatprep.subr.bf16.mxu0 0
        %959 = vmatpush1.bf16.msra.mxu0 0
        %960 = vmatprep.subr.bf16.mxu0 0
        %961 = vmatpush1.bf16.msra.mxu0 0
        %962 = vmatprep.mubr.bf16.mxu0 0
        %963 = vmatmul.mubr.bf16.gmra.mrb[0].mxu0 %v865
        %v964 = vpop.f32.mrb[0].mxu0
        %v965 = vadd.f32 %v916, %v964
        %v966 = vpop.f32.mrb[0].mxu0
        %v967 = vpop.f32.mrb[0].mxu0
        %v968 = vpop.f32.mrb[0].mxu0
        %969 = vdwg.mxu0
        %v970 = vld [vmem:[#allocation10] sm:$0xf]
        %v971 = vld [vmem:[#allocation10 + $0x4] sm:$0xf]
        %v972 = vld [vmem:[#allocation10 + $0x8] sm:$0xf]
        %v973 = vld [vmem:[#allocation10 + $0xc] sm:$0xf]
        %v974 = vld [vmem:[#allocation14] sm:$0x1]
        %v976 = vlaneseq
        %v977 = vshrl.u32 %v976, 7
        %v978 = vsub.s32 0, %v977
        %v979 = vrot.slane %v974, %v978
        %v985 = vunpack.c.l.b16 %v970
        %v986 = vunpack.c.l.b16 %v971
        %v987 = vunpack.c.l.b16 %v972
        %v988 = vunpack.c.l.b16 %v973
        %v989 = vpack.c.b16 %v986, %v985
        %v990 = vpack.c.b16 %v988, %v987
        %993 = vmatprep.subr.bf16.mxu0 0
        %994 = vmatpush1.bf16.msra.mxu0 %v989
        %995 = vmatprep.subr.bf16.mxu0 0
        %996 = vmatpush1.bf16.msra.mxu0 %v990
        %997 = vmatprep.subr.bf16.mxu0 0
        %998 = vmatpush1.bf16.msra.mxu0 0
        %999 = vmatprep.subr.bf16.mxu0 0
        %1000 = vmatpush1.bf16.msra.mxu0 0
        %1001 = vmatprep.subr.bf16.mxu0 0
        %1002 = vmatpush1.bf16.msra.mxu0 0
        %1003 = vmatprep.subr.bf16.mxu0 0
        %1004 = vmatpush1.bf16.msra.mxu0 0
        %1005 = vmatprep.subr.bf16.mxu0 0
        %1006 = vmatpush1.bf16.msra.mxu0 0
        %1007 = vmatprep.subr.bf16.mxu0 0
        %1008 = vmatpush1.bf16.msra.mxu0 0
        %1009 = vmatprep.subr.bf16.mxu0 0
        %1010 = vmatpush1.bf16.msra.mxu0 0
        %1011 = vmatprep.subr.bf16.mxu0 0
        %1012 = vmatpush1.bf16.msra.mxu0 0
        %1013 = vmatprep.subr.bf16.mxu0 0
        %1014 = vmatpush1.bf16.msra.mxu0 0
        %1015 = vmatprep.subr.bf16.mxu0 0
        %1016 = vmatpush1.bf16.msra.mxu0 0
        %1017 = vmatprep.subr.bf16.mxu0 0
        %1018 = vmatpush1.bf16.msra.mxu0 0
        %1019 = vmatprep.subr.bf16.mxu0 0
        %1020 = vmatpush1.bf16.msra.mxu0 0
        %1021 = vmatprep.subr.bf16.mxu0 0
        %1022 = vmatpush1.bf16.msra.mxu0 0
        %1023 = vmatprep.subr.bf16.mxu0 0
        %1024 = vmatpush1.bf16.msra.mxu0 0
        %1025 = vmatprep.mubr.bf16.mxu0 0
        %1026 = vmatmul.mubr.bf16.gmra.mrb[0].mxu0 %v865
        %v1027 = vpop.f32.mrb[0].mxu0
        %v1028 = vadd.f32 %v979, %v1027
        %v1029 = vpop.f32.mrb[0].mxu0
        %v1030 = vpop.f32.mrb[0].mxu0
        %v1031 = vpop.f32.mrb[0].mxu0
        %1032 = vdwg.mxu0
        %v1033 = vmul.f32 %v902, 0.35355338
        %1035 = vrot.lane.b32.xlu0 %v1033, 120
        %v1036 = vpop.permute.xlu0 %1035
        %1038 = vrot.lane.b32.xlu0 %v1033, 112
        %v1039 = vpop.permute.xlu0 %1038
        %1041 = vrot.lane.b32.xlu0 %v1033, 104
        %v1042 = vpop.permute.xlu0 %1041
        %v1044 = vcombine.low %v1033, %v1039
        %v1045 = vcombine.high %v1033, %v1039
        %v1047 = vunpack.c.l.s4 1983009808
        %v1048 = vunpack.c.0.s8 %v1047
        %v1049 = vlaneseq
        %v1050 = vshrl.u32 %v1049, 7
        %v1051 = vsub.s32 %v1048, %v1050
        %v1052 = vrot.slane %v1044, %v1051
        %v1054 = vunpack.c.l.s4 1983009808
        %v1055 = vunpack.c.0.s8 %v1054
        %v1056 = vlaneseq
        %v1057 = vshrl.u32 %v1056, 7
        %v1058 = vsub.s32 %v1055, %v1057
        %v1059 = vrot.slane %v1045, %v1058
        %v1060 = vcombine.low %v1036, %v1042
        %v1061 = vcombine.high %v1036, %v1042
        %v1063 = vunpack.c.l.s4 1983009808
        %v1064 = vunpack.c.0.s8 %v1063
        %v1065 = vlaneseq
        %v1066 = vshrl.u32 %v1065, 7
        %v1067 = vsub.s32 %v1064, %v1066
        %v1068 = vrot.slane %v1060, %v1067
        %v1070 = vunpack.c.l.s4 1983009808
        %v1071 = vunpack.c.0.s8 %v1070
        %v1072 = vlaneseq
        %v1073 = vshrl.u32 %v1072, 7
        %v1074 = vsub.s32 %v1071, %v1073
        %v1075 = vrot.slane %v1061, %v1074
        %v1076 = vcombine.low %v1052, %v1068
        %v1077 = vcombine.high %v1052, %v1068
        %v1079 = vunpack.c.l.s4 1934713408
        %v1080 = vunpack.c.0.s8 %v1079
        %v1081 = vlaneseq
        %v1082 = vshrl.u32 %v1081, 7
        %v1083 = vsub.s32 %v1080, %v1082
        %v1084 = vrot.slane %v1076, %v1083
        %v1086 = vunpack.c.l.s4 1934713408
        %v1087 = vunpack.c.0.s8 %v1086
        %v1088 = vlaneseq
        %v1089 = vshrl.u32 %v1088, 7
        %v1090 = vsub.s32 %v1087, %v1089
        %v1091 = vrot.slane %v1077, %v1090
        %v1092 = vcombine.low %v1059, %v1075
        %v1093 = vcombine.high %v1059, %v1075
        %v1095 = vunpack.c.l.s4 1934713408
        %v1096 = vunpack.c.0.s8 %v1095
        %v1097 = vlaneseq
        %v1098 = vshrl.u32 %v1097, 7
        %v1099 = vsub.s32 %v1096, %v1098
        %v1100 = vrot.slane %v1092, %v1099
        %v1102 = vunpack.c.l.s4 1934713408
        %v1103 = vunpack.c.0.s8 %v1102
        %v1104 = vlaneseq
        %v1105 = vshrl.u32 %v1104, 7
        %v1106 = vsub.s32 %v1103, %v1105
        %v1107 = vrot.slane %v1093, %v1106
        %v1108 = vcombine.high %v1084, 0.0
        %v1109 = vcombine.high %v1091, 0.0
        %v1110 = vcombine.high %v1100, 0.0
        %v1111 = vcombine.high %v1107, 0.0
        %v1112 = vcombine.low %v1084, %v1091
        %v1114 = vunpack.c.l.s4 1983009808
        %v1115 = vunpack.c.0.s8 %v1114
        %v1116 = vlaneseq
        %v1117 = vshrl.u32 %v1116, 7
        %v1118 = vsub.s32 %v1115, %v1117
        %v1119 = vrot.slane %v1112, %v1118
        %v1120 = vcombine.low %v1108, %v1109
        %v1122 = vunpack.c.l.s4 1983009808
        %v1123 = vunpack.c.0.s8 %v1122
        %v1124 = vlaneseq
        %v1125 = vshrl.u32 %v1124, 7
        %v1126 = vsub.s32 %v1123, %v1125
        %v1127 = vrot.slane %v1120, %v1126
        %v1128 = vcombine.low %v1100, %v1107
        %v1130 = vunpack.c.l.s4 1983009808
        %v1131 = vunpack.c.0.s8 %v1130
        %v1132 = vlaneseq
        %v1133 = vshrl.u32 %v1132, 7
        %v1134 = vsub.s32 %v1131, %v1133
        %v1135 = vrot.slane %v1128, %v1134
        %v1136 = vcombine.low %v1110, %v1111
        %v1138 = vunpack.c.l.s4 1983009808
        %v1139 = vunpack.c.0.s8 %v1138
        %v1140 = vlaneseq
        %v1141 = vshrl.u32 %v1140, 7
        %v1142 = vsub.s32 %v1139, %v1141
        %v1143 = vrot.slane %v1136, %v1142
        %v1144 = vcombine.low %v1119, %v1127
        %v1145 = vcombine.high %v1119, %v1127
        %v1147 = vunpack.c.l.s4 1934713408
        %v1148 = vunpack.c.0.s8 %v1147
        %v1149 = vlaneseq
        %v1150 = vshrl.u32 %v1149, 7
        %v1151 = vsub.s32 %v1148, %v1150
        %v1152 = vrot.slane %v1144, %v1151
        %v1154 = vunpack.c.l.s4 1934713408
        %v1155 = vunpack.c.0.s8 %v1154
        %v1156 = vlaneseq
        %v1157 = vshrl.u32 %v1156, 7
        %v1158 = vsub.s32 %v1155, %v1157
        %v1159 = vrot.slane %v1145, %v1158
        %v1160 = vcombine.low %v1135, %v1143
        %v1161 = vcombine.high %v1135, %v1143
        %v1163 = vunpack.c.l.s4 1934713408
        %v1164 = vunpack.c.0.s8 %v1163
        %v1165 = vlaneseq
        %v1166 = vshrl.u32 %v1165, 7
        %v1167 = vsub.s32 %v1164, %v1166
        %v1168 = vrot.slane %v1160, %v1167
        %v1170 = vunpack.c.l.s4 1934713408
        %v1171 = vunpack.c.0.s8 %v1170
        %v1172 = vlaneseq
        %v1173 = vshrl.u32 %v1172, 7
        %v1174 = vsub.s32 %v1171, %v1173
        %v1175 = vrot.slane %v1161, %v1174
        %v1176 = vcombine.low %v1152, %v1168
        %v1177 = vcombine.high %v1152, %v1168
        %v1178 = vcombine.low %v1159, %v1175
        %v1179 = vcombine.high %v1159, %v1175
        %v1180 = vpack.c.bf16 %v1176, %v1176
        %v1181 = vpack.c.bf16 %v1177, %v1177
        %v1182 = vpack.c.bf16 %v1178, %v1178
        %v1183 = vpack.c.bf16 %v1179, %v1179
        %1185 = vrot.lane.b32.xlu0 %v965, 120
        %v1186 = vpop.permute.xlu0 %1185
        %1188 = vrot.lane.b32.xlu0 %v965, 112
        %v1189 = vpop.permute.xlu0 %1188
        %1191 = vrot.lane.b32.xlu0 %v965, 104
        %v1192 = vpop.permute.xlu0 %1191
        %v1194 = vcombine.low %v965, %v1189
        %v1195 = vcombine.high %v965, %v1189
        %v1197 = vunpack.c.l.s4 1983009808
        %v1198 = vunpack.c.0.s8 %v1197
        %v1199 = vlaneseq
        %v1200 = vshrl.u32 %v1199, 7
        %v1201 = vsub.s32 %v1198, %v1200
        %v1202 = vrot.slane %v1194, %v1201
        %v1204 = vunpack.c.l.s4 1983009808
        %v1205 = vunpack.c.0.s8 %v1204
        %v1206 = vlaneseq
        %v1207 = vshrl.u32 %v1206, 7
        %v1208 = vsub.s32 %v1205, %v1207
        %v1209 = vrot.slane %v1195, %v1208
        %v1210 = vcombine.low %v1186, %v1192
        %v1211 = vcombine.high %v1186, %v1192
        %v1213 = vunpack.c.l.s4 1983009808
        %v1214 = vunpack.c.0.s8 %v1213
        %v1215 = vlaneseq
        %v1216 = vshrl.u32 %v1215, 7
        %v1217 = vsub.s32 %v1214, %v1216
        %v1218 = vrot.slane %v1210, %v1217
        %v1220 = vunpack.c.l.s4 1983009808
        %v1221 = vunpack.c.0.s8 %v1220
        %v1222 = vlaneseq
        %v1223 = vshrl.u32 %v1222, 7
        %v1224 = vsub.s32 %v1221, %v1223
        %v1225 = vrot.slane %v1211, %v1224
        %v1226 = vcombine.low %v1202, %v1218
        %v1227 = vcombine.high %v1202, %v1218
        %v1229 = vunpack.c.l.s4 1934713408
        %v1230 = vunpack.c.0.s8 %v1229
        %v1231 = vlaneseq
        %v1232 = vshrl.u32 %v1231, 7
        %v1233 = vsub.s32 %v1230, %v1232
        %v1234 = vrot.slane %v1226, %v1233
        %v1236 = vunpack.c.l.s4 1934713408
        %v1237 = vunpack.c.0.s8 %v1236
        %v1238 = vlaneseq
        %v1239 = vshrl.u32 %v1238, 7
        %v1240 = vsub.s32 %v1237, %v1239
        %v1241 = vrot.slane %v1227, %v1240
        %v1242 = vcombine.low %v1209, %v1225
        %v1243 = vcombine.high %v1209, %v1225
        %v1245 = vunpack.c.l.s4 1934713408
        %v1246 = vunpack.c.0.s8 %v1245
        %v1247 = vlaneseq
        %v1248 = vshrl.u32 %v1247, 7
        %v1249 = vsub.s32 %v1246, %v1248
        %v1250 = vrot.slane %v1242, %v1249
        %v1252 = vunpack.c.l.s4 1934713408
        %v1253 = vunpack.c.0.s8 %v1252
        %v1254 = vlaneseq
        %v1255 = vshrl.u32 %v1254, 7
        %v1256 = vsub.s32 %v1253, %v1255
        %v1257 = vrot.slane %v1243, %v1256
        %v1258 = vcombine.high %v1234, 0.0
        %v1259 = vcombine.high %v1241, 0.0
        %v1260 = vcombine.high %v1250, 0.0
        %v1261 = vcombine.high %v1257, 0.0
        %v1262 = vcombine.low %v1234, %v1241
        %v1264 = vunpack.c.l.s4 1983009808
        %v1265 = vunpack.c.0.s8 %v1264
        %v1266 = vlaneseq
        %v1267 = vshrl.u32 %v1266, 7
        %v1268 = vsub.s32 %v1265, %v1267
        %v1269 = vrot.slane %v1262, %v1268
        %v1270 = vcombine.low %v1258, %v1259
        %v1272 = vunpack.c.l.s4 1983009808
        %v1273 = vunpack.c.0.s8 %v1272
        %v1274 = vlaneseq
        %v1275 = vshrl.u32 %v1274, 7
        %v1276 = vsub.s32 %v1273, %v1275
        %v1277 = vrot.slane %v1270, %v1276
        %v1278 = vcombine.low %v1250, %v1257
        %v1280 = vunpack.c.l.s4 1983009808
        %v1281 = vunpack.c.0.s8 %v1280
        %v1282 = vlaneseq
        %v1283 = vshrl.u32 %v1282, 7
        %v1284 = vsub.s32 %v1281, %v1283
        %v1285 = vrot.slane %v1278, %v1284
        %v1286 = vcombine.low %v1260, %v1261
        %v1288 = vunpack.c.l.s4 1983009808
        %v1289 = vunpack.c.0.s8 %v1288
        %v1290 = vlaneseq
        %v1291 = vshrl.u32 %v1290, 7
        %v1292 = vsub.s32 %v1289, %v1291
        %v1293 = vrot.slane %v1286, %v1292
        %v1294 = vcombine.low %v1269, %v1277
        %v1295 = vcombine.high %v1269, %v1277
        %v1297 = vunpack.c.l.s4 1934713408
        %v1298 = vunpack.c.0.s8 %v1297
        %v1299 = vlaneseq
        %v1300 = vshrl.u32 %v1299, 7
        %v1301 = vsub.s32 %v1298, %v1300
        %v1302 = vrot.slane %v1294, %v1301
        %v1304 = vunpack.c.l.s4 1934713408
        %v1305 = vunpack.c.0.s8 %v1304
        %v1306 = vlaneseq
        %v1307 = vshrl.u32 %v1306, 7
        %v1308 = vsub.s32 %v1305, %v1307
        %v1309 = vrot.slane %v1295, %v1308
        %v1310 = vcombine.low %v1285, %v1293
        %v1311 = vcombine.high %v1285, %v1293
        %v1313 = vunpack.c.l.s4 1934713408
        %v1314 = vunpack.c.0.s8 %v1313
        %v1315 = vlaneseq
        %v1316 = vshrl.u32 %v1315, 7
        %v1317 = vsub.s32 %v1314, %v1316
        %v1318 = vrot.slane %v1310, %v1317
        %v1320 = vunpack.c.l.s4 1934713408
        %v1321 = vunpack.c.0.s8 %v1320
        %v1322 = vlaneseq
        %v1323 = vshrl.u32 %v1322, 7
        %v1324 = vsub.s32 %v1321, %v1323
        %v1325 = vrot.slane %v1311, %v1324
        %v1326 = vcombine.low %v1302, %v1318
        %v1327 = vcombine.high %v1302, %v1318
        %v1328 = vcombine.low %v1309, %v1325
        %v1329 = vcombine.high %v1309, %v1325
        %v1330 = vpack.c.bf16 %v1326, %v1326
        %v1331 = vpack.c.bf16 %v1327, %v1327
        %v1332 = vpack.c.bf16 %v1328, %v1328
        %v1333 = vpack.c.bf16 %v1329, %v1329
        %1335 = vrot.lane.b32.xlu0 %v1028, 120
        %v1336 = vpop.permute.xlu0 %1335
        %1338 = vrot.lane.b32.xlu0 %v1028, 112
        %v1339 = vpop.permute.xlu0 %1338
        %1341 = vrot.lane.b32.xlu0 %v1028, 104
        %v1342 = vpop.permute.xlu0 %1341
        %v1344 = vcombine.low %v1028, %v1339
        %v1345 = vcombine.high %v1028, %v1339
        %v1347 = vunpack.c.l.s4 1983009808
        %v1348 = vunpack.c.0.s8 %v1347
        %v1349 = vlaneseq
        %v1350 = vshrl.u32 %v1349, 7
        %v1351 = vsub.s32 %v1348, %v1350
        %v1352 = vrot.slane %v1344, %v1351
        %v1354 = vunpack.c.l.s4 1983009808
        %v1355 = vunpack.c.0.s8 %v1354
        %v1356 = vlaneseq
        %v1357 = vshrl.u32 %v1356, 7
        %v1358 = vsub.s32 %v1355, %v1357
        %v1359 = vrot.slane %v1345, %v1358
        %v1360 = vcombine.low %v1336, %v1342
        %v1361 = vcombine.high %v1336, %v1342
        %v1363 = vunpack.c.l.s4 1983009808
        %v1364 = vunpack.c.0.s8 %v1363
        %v1365 = vlaneseq
        %v1366 = vshrl.u32 %v1365, 7
        %v1367 = vsub.s32 %v1364, %v1366
        %v1368 = vrot.slane %v1360, %v1367
        %v1370 = vunpack.c.l.s4 1983009808
        %v1371 = vunpack.c.0.s8 %v1370
        %v1372 = vlaneseq
        %v1373 = vshrl.u32 %v1372, 7
        %v1374 = vsub.s32 %v1371, %v1373
        %v1375 = vrot.slane %v1361, %v1374
        %v1376 = vcombine.low %v1352, %v1368
        %v1377 = vcombine.high %v1352, %v1368
        %v1379 = vunpack.c.l.s4 1934713408
        %v1380 = vunpack.c.0.s8 %v1379
        %v1381 = vlaneseq
        %v1382 = vshrl.u32 %v1381, 7
        %v1383 = vsub.s32 %v1380, %v1382
        %v1384 = vrot.slane %v1376, %v1383
        %v1386 = vunpack.c.l.s4 1934713408
        %v1387 = vunpack.c.0.s8 %v1386
        %v1388 = vlaneseq
        %v1389 = vshrl.u32 %v1388, 7
        %v1390 = vsub.s32 %v1387, %v1389
        %v1391 = vrot.slane %v1377, %v1390
        %v1392 = vcombine.low %v1359, %v1375
        %v1393 = vcombine.high %v1359, %v1375
        %v1395 = vunpack.c.l.s4 1934713408
        %v1396 = vunpack.c.0.s8 %v1395
        %v1397 = vlaneseq
        %v1398 = vshrl.u32 %v1397, 7
        %v1399 = vsub.s32 %v1396, %v1398
        %v1400 = vrot.slane %v1392, %v1399
        %v1402 = vunpack.c.l.s4 1934713408
        %v1403 = vunpack.c.0.s8 %v1402
        %v1404 = vlaneseq
        %v1405 = vshrl.u32 %v1404, 7
        %v1406 = vsub.s32 %v1403, %v1405
        %v1407 = vrot.slane %v1393, %v1406
        %v1408 = vcombine.high %v1384, 0.0
        %v1409 = vcombine.high %v1391, 0.0
        %v1410 = vcombine.high %v1400, 0.0
        %v1411 = vcombine.high %v1407, 0.0
        %v1412 = vcombine.low %v1384, %v1391
        %v1414 = vunpack.c.l.s4 1983009808
        %v1415 = vunpack.c.0.s8 %v1414
        %v1416 = vlaneseq
        %v1417 = vshrl.u32 %v1416, 7
        %v1418 = vsub.s32 %v1415, %v1417
        %v1419 = vrot.slane %v1412, %v1418
        %v1420 = vcombine.low %v1408, %v1409
        %v1422 = vunpack.c.l.s4 1983009808
        %v1423 = vunpack.c.0.s8 %v1422
        %v1424 = vlaneseq
        %v1425 = vshrl.u32 %v1424, 7
        %v1426 = vsub.s32 %v1423, %v1425
        %v1427 = vrot.slane %v1420, %v1426
        %v1428 = vcombine.low %v1400, %v1407
        %v1430 = vunpack.c.l.s4 1983009808
        %v1431 = vunpack.c.0.s8 %v1430
        %v1432 = vlaneseq
        %v1433 = vshrl.u32 %v1432, 7
        %v1434 = vsub.s32 %v1431, %v1433
        %v1435 = vrot.slane %v1428, %v1434
        %v1436 = vcombine.low %v1410, %v1411
        %v1438 = vunpack.c.l.s4 1983009808
        %v1439 = vunpack.c.0.s8 %v1438
        %v1440 = vlaneseq
        %v1441 = vshrl.u32 %v1440, 7
        %v1442 = vsub.s32 %v1439, %v1441
        %v1443 = vrot.slane %v1436, %v1442
        %v1444 = vcombine.low %v1419, %v1427
        %v1445 = vcombine.high %v1419, %v1427
        %v1447 = vunpack.c.l.s4 1934713408
        %v1448 = vunpack.c.0.s8 %v1447
        %v1449 = vlaneseq
        %v1450 = vshrl.u32 %v1449, 7
        %v1451 = vsub.s32 %v1448, %v1450
        %v1452 = vrot.slane %v1444, %v1451
        %v1454 = vunpack.c.l.s4 1934713408
        %v1455 = vunpack.c.0.s8 %v1454
        %v1456 = vlaneseq
        %v1457 = vshrl.u32 %v1456, 7
        %v1458 = vsub.s32 %v1455, %v1457
        %v1459 = vrot.slane %v1445, %v1458
        %v1460 = vcombine.low %v1435, %v1443
        %v1461 = vcombine.high %v1435, %v1443
        %v1463 = vunpack.c.l.s4 1934713408
        %v1464 = vunpack.c.0.s8 %v1463
        %v1465 = vlaneseq
        %v1466 = vshrl.u32 %v1465, 7
        %v1467 = vsub.s32 %v1464, %v1466
        %v1468 = vrot.slane %v1460, %v1467
        %v1470 = vunpack.c.l.s4 1934713408
        %v1471 = vunpack.c.0.s8 %v1470
        %v1472 = vlaneseq
        %v1473 = vshrl.u32 %v1472, 7
        %v1474 = vsub.s32 %v1471, %v1473
        %v1475 = vrot.slane %v1461, %v1474
        %v1476 = vcombine.low %v1452, %v1468
        %v1477 = vcombine.high %v1452, %v1468
        %v1478 = vcombine.low %v1459, %v1475
        %v1479 = vcombine.high %v1459, %v1475
        %v1480 = vpack.c.bf16 %v1476, %v1476
        %v1481 = vpack.c.bf16 %v1477, %v1477
        %v1482 = vpack.c.bf16 %v1478, %v1478
        %v1483 = vpack.c.bf16 %v1479, %v1479
        %v1484 = vld [vmem:[%s716] sm:$0x1]
        %vm1485 = vcmp.gt.f32.partialorder %v1484, 0.5
        %v1486 = vsel %vm1485, 0.0, -1e+30
        %v1488 = vlaneseq
        %v1489 = vshrl.u32 %v1488, 7
        %v1490 = vsub.s32 0, %v1489
        %v1491 = vrot.slane %v1486, %v1490
        %vm1493 = vcmask 64512
        %v1495 = vsel %vm1493, %v1180, 0
        %v1498 = vsel %vm1493, %v1330, 0
        %1500 = vmatprep.subr.bf16.mxu0 0
        %1501 = vmatpush1.bf16.xpose.msra.mxu0 %v1498
        %1502 = vmatprep.subr.bf16.mxu0 0
        %1503 = vmatpush1.bf16.xpose.msra.mxu0 0
        %1504 = vmatprep.subr.bf16.mxu0 0
        %1505 = vmatpush1.bf16.xpose.msra.mxu0 0
        %1506 = vmatprep.subr.bf16.mxu0 0
        %1507 = vmatpush1.bf16.xpose.msra.mxu0 0
        %1508 = vmatprep.subr.bf16.mxu0 0
        %1509 = vmatpush1.bf16.xpose.msra.mxu0 0
        %1510 = vmatprep.subr.bf16.mxu0 0
        %1511 = vmatpush1.bf16.xpose.msra.mxu0 0
        %1512 = vmatprep.subr.bf16.mxu0 0
        %1513 = vmatpush1.bf16.xpose.msra.mxu0 0
        %1514 = vmatprep.subr.bf16.mxu0 0
        %1515 = vmatpush1.bf16.xpose.msra.mxu0 0
        %1516 = vmatprep.subr.bf16.mxu0 0
        %1517 = vmatpush1.bf16.xpose.msra.mxu0 0
        %1518 = vmatprep.subr.bf16.mxu0 0
        %1519 = vmatpush1.bf16.xpose.msra.mxu0 0
        %1520 = vmatprep.subr.bf16.mxu0 0
        %1521 = vmatpush1.bf16.xpose.msra.mxu0 0
        %1522 = vmatprep.subr.bf16.mxu0 0
        %1523 = vmatpush1.bf16.xpose.msra.mxu0 0
        %1524 = vmatprep.subr.bf16.mxu0 0
        %1525 = vmatpush1.bf16.xpose.msra.mxu0 0
        %1526 = vmatprep.subr.bf16.mxu0 0
        %1527 = vmatpush1.bf16.xpose.msra.mxu0 0
        %1528 = vmatprep.subr.bf16.mxu0 0
        %1529 = vmatpush1.bf16.xpose.msra.mxu0 0
        %1530 = vmatprep.subr.bf16.mxu0 0
        %1531 = vmatpush1.bf16.xpose.msra.mxu0 0
        %1532 = vmatprep.mubr.bf16.mxu0 0
        %1533 = vmatmul.mubr.bf16.gmra.mrb[0].mxu0 %v1495
        %v1534 = vpop.f32.mrb[0].mxu0
        %v1535 = vadd.f32 %v1491, %v1534
        %v1536 = vpop.f32.mrb[0].mxu0
        %v1537 = vpop.f32.mrb[0].mxu0
        %v1538 = vpop.f32.mrb[0].mxu0
        %1539 = vdwg.mxu0
        %v1541 = vsel %vm1493, %v1181, 0
        %v1544 = vsel %vm1493, %v1331, 0
        %1546 = vmatprep.subr.bf16.mxu0 0
        %1547 = vmatpush1.bf16.xpose.msra.mxu0 %v1544
        %1548 = vmatprep.subr.bf16.mxu0 0
        %1549 = vmatpush1.bf16.xpose.msra.mxu0 0
        %1550 = vmatprep.subr.bf16.mxu0 0
        %1551 = vmatpush1.bf16.xpose.msra.mxu0 0
        %1552 = vmatprep.subr.bf16.mxu0 0
        %1553 = vmatpush1.bf16.xpose.msra.mxu0 0
        %1554 = vmatprep.subr.bf16.mxu0 0
        %1555 = vmatpush1.bf16.xpose.msra.mxu0 0
        %1556 = vmatprep.subr.bf16.mxu0 0
        %1557 = vmatpush1.bf16.xpose.msra.mxu0 0
        %1558 = vmatprep.subr.bf16.mxu0 0
        %1559 = vmatpush1.bf16.xpose.msra.mxu0 0
        %1560 = vmatprep.subr.bf16.mxu0 0
        %1561 = vmatpush1.bf16.xpose.msra.mxu0 0
        %1562 = vmatprep.subr.bf16.mxu0 0
        %1563 = vmatpush1.bf16.xpose.msra.mxu0 0
        %1564 = vmatprep.subr.bf16.mxu0 0
        %1565 = vmatpush1.bf16.xpose.msra.mxu0 0
        %1566 = vmatprep.subr.bf16.mxu0 0
        %1567 = vmatpush1.bf16.xpose.msra.mxu0 0
        %1568 = vmatprep.subr.bf16.mxu0 0
        %1569 = vmatpush1.bf16.xpose.msra.mxu0 0
        %1570 = vmatprep.subr.bf16.mxu0 0
        %1571 = vmatpush1.bf16.xpose.msra.mxu0 0
        %1572 = vmatprep.subr.bf16.mxu0 0
        %1573 = vmatpush1.bf16.xpose.msra.mxu0 0
        %1574 = vmatprep.subr.bf16.mxu0 0
        %1575 = vmatpush1.bf16.xpose.msra.mxu0 0
        %1576 = vmatprep.subr.bf16.mxu0 0
        %1577 = vmatpush1.bf16.xpose.msra.mxu0 0
        %1578 = vmatprep.mubr.bf16.mxu0 0
        %1579 = vmatmul.mubr.bf16.gmra.mrb[0].mxu0 %v1541
        %v1580 = vpop.f32.mrb[0].mxu0
        %v1581 = vadd.f32 %v1491, %v1580
        %v1582 = vpop.f32.mrb[0].mxu0
        %v1583 = vpop.f32.mrb[0].mxu0
        %v1584 = vpop.f32.mrb[0].mxu0
        %1585 = vdwg.mxu0
        %v1587 = vsel %vm1493, %v1182, 0
        %v1590 = vsel %vm1493, %v1332, 0
        %1592 = vmatprep.subr.bf16.mxu0 0
        %1593 = vmatpush1.bf16.xpose.msra.mxu0 %v1590
        %1594 = vmatprep.subr.bf16.mxu0 0
        %1595 = vmatpush1.bf16.xpose.msra.mxu0 0
        %1596 = vmatprep.subr.bf16.mxu0 0
        %1597 = vmatpush1.bf16.xpose.msra.mxu0 0
        %1598 = vmatprep.subr.bf16.mxu0 0
        %1599 = vmatpush1.bf16.xpose.msra.mxu0 0
        %1600 = vmatprep.subr.bf16.mxu0 0
        %1601 = vmatpush1.bf16.xpose.msra.mxu0 0
        %1602 = vmatprep.subr.bf16.mxu0 0
        %1603 = vmatpush1.bf16.xpose.msra.mxu0 0
        %1604 = vmatprep.subr.bf16.mxu0 0
        %1605 = vmatpush1.bf16.xpose.msra.mxu0 0
        %1606 = vmatprep.subr.bf16.mxu0 0
        %1607 = vmatpush1.bf16.xpose.msra.mxu0 0
        %1608 = vmatprep.subr.bf16.mxu0 0
        %1609 = vmatpush1.bf16.xpose.msra.mxu0 0
        %1610 = vmatprep.subr.bf16.mxu0 0
        %1611 = vmatpush1.bf16.xpose.msra.mxu0 0
        %1612 = vmatprep.subr.bf16.mxu0 0
        %1613 = vmatpush1.bf16.xpose.msra.mxu0 0
        %1614 = vmatprep.subr.bf16.mxu0 0
        %1615 = vmatpush1.bf16.xpose.msra.mxu0 0
        %1616 = vmatprep.subr.bf16.mxu0 0
        %1617 = vmatpush1.bf16.xpose.msra.mxu0 0
        %1618 = vmatprep.subr.bf16.mxu0 0
        %1619 = vmatpush1.bf16.xpose.msra.mxu0 0
        %1620 = vmatprep.subr.bf16.mxu0 0
        %1621 = vmatpush1.bf16.xpose.msra.mxu0 0
        %1622 = vmatprep.subr.bf16.mxu0 0
        %1623 = vmatpush1.bf16.xpose.msra.mxu0 0
        %1624 = vmatprep.mubr.bf16.mxu0 0
        %1625 = vmatmul.mubr.bf16.gmra.mrb[0].mxu0 %v1587
        %v1626 = vpop.f32.mrb[0].mxu0
        %v1627 = vadd.f32 %v1491, %v1626
        %v1628 = vpop.f32.mrb[0].mxu0
        %v1629 = vpop.f32.mrb[0].mxu0
        %v1630 = vpop.f32.mrb[0].mxu0
        %1631 = vdwg.mxu0
        %v1633 = vsel %vm1493, %v1183, 0
        %v1636 = vsel %vm1493, %v1333, 0
        %1638 = vmatprep.subr.bf16.mxu0 0
        %1639 = vmatpush1.bf16.xpose.msra.mxu0 %v1636
        %1640 = vmatprep.subr.bf16.mxu0 0
        %1641 = vmatpush1.bf16.xpose.msra.mxu0 0
        %1642 = vmatprep.subr.bf16.mxu0 0
        %1643 = vmatpush1.bf16.xpose.msra.mxu0 0
        %1644 = vmatprep.subr.bf16.mxu0 0
        %1645 = vmatpush1.bf16.xpose.msra.mxu0 0
        %1646 = vmatprep.subr.bf16.mxu0 0
        %1647 = vmatpush1.bf16.xpose.msra.mxu0 0
        %1648 = vmatprep.subr.bf16.mxu0 0
        %1649 = vmatpush1.bf16.xpose.msra.mxu0 0
        %1650 = vmatprep.subr.bf16.mxu0 0
        %1651 = vmatpush1.bf16.xpose.msra.mxu0 0
        %1652 = vmatprep.subr.bf16.mxu0 0
        %1653 = vmatpush1.bf16.xpose.msra.mxu0 0
        %1654 = vmatprep.subr.bf16.mxu0 0
        %1655 = vmatpush1.bf16.xpose.msra.mxu0 0
        %1656 = vmatprep.subr.bf16.mxu0 0
        %1657 = vmatpush1.bf16.xpose.msra.mxu0 0
        %1658 = vmatprep.subr.bf16.mxu0 0
        %1659 = vmatpush1.bf16.xpose.msra.mxu0 0
        %1660 = vmatprep.subr.bf16.mxu0 0
        %1661 = vmatpush1.bf16.xpose.msra.mxu0 0
        %1662 = vmatprep.subr.bf16.mxu0 0
        %1663 = vmatpush1.bf16.xpose.msra.mxu0 0
        %1664 = vmatprep.subr.bf16.mxu0 0
        %1665 = vmatpush1.bf16.xpose.msra.mxu0 0
        %1666 = vmatprep.subr.bf16.mxu0 0
        %1667 = vmatpush1.bf16.xpose.msra.mxu0 0
        %1668 = vmatprep.subr.bf16.mxu0 0
        %1669 = vmatpush1.bf16.xpose.msra.mxu0 0
        %1670 = vmatprep.mubr.bf16.mxu0 0
        %1671 = vmatmul.mubr.bf16.gmra.mrb[0].mxu0 %v1633
        %v1672 = vpop.f32.mrb[0].mxu0
        %v1673 = vadd.f32 %v1491, %v1672
        %v1674 = vpop.f32.mrb[0].mxu0
        %v1675 = vpop.f32.mrb[0].mxu0
        %v1676 = vpop.f32.mrb[0].mxu0
        %1677 = vdwg.mxu0
        %v1678 = vsel %vm1493, %v1535, -inf
        %1679 = vmax.xlane.f32.xlu0 %v1678
        %v1680 = vpop.xlane.xlu0 %1679
        %v1681 = vsel %vm1493, %v1581, -inf
        %1682 = vmax.xlane.f32.xlu0 %v1681
        %v1683 = vpop.xlane.xlu0 %1682
        %v1684 = vsel %vm1493, %v1627, -inf
        %1685 = vmax.xlane.f32.xlu0 %v1684
        %v1686 = vpop.xlane.xlu0 %1685
        %v1687 = vsel %vm1493, %v1673, -inf
        %1688 = vmax.xlane.f32.xlu0 %v1687
        %v1689 = vpop.xlane.xlu0 %1688
        %v1690 = vsub.f32 %v1535, %v1680
        %v1691 = vsub.f32 %v1581, %v1683
        %v1692 = vsub.f32 %v1627, %v1686
        %v1693 = vsub.f32 %v1673, %v1689
        %v1694 = vmul.f32 %v1690, 1.442695
        %v1695 = vpow.pop %v1694
        %v1696 = vmul.f32 %v1691, 1.442695
        %v1697 = vpow.pop %v1696
        %v1698 = vmul.f32 %v1692, 1.442695
        %v1699 = vpow.pop %v1698
        %v1700 = vmul.f32 %v1693, 1.442695
        %v1701 = vpow.pop %v1700
        %v1702 = vsel %vm1493, %v1695, 0.0
        %1703 = vadd.xlane.f32.xlu0 %v1702
        %v1704 = vpop.xlane.xlu0 %1703
        %v1705 = vsel %vm1493, %v1697, 0.0
        %1706 = vadd.xlane.f32.xlu0 %v1705
        %v1707 = vpop.xlane.xlu0 %1706
        %v1708 = vsel %vm1493, %v1699, 0.0
        %1709 = vadd.xlane.f32.xlu0 %v1708
        %v1710 = vpop.xlane.xlu0 %1709
        %v1711 = vsel %vm1493, %v1701, 0.0
        %1712 = vadd.xlane.f32.xlu0 %v1711
        %v1713 = vpop.xlane.xlu0 %1712
        %v1714 = vrcp.pop %v1704
        %v1715 = vrcp.pop %v1707
        %v1716 = vrcp.pop %v1710
        %v1717 = vrcp.pop %v1713
        %v1718 = vmul.f32 %v1695, %v1714
        %v1719 = vmul.f32 %v1697, %v1715
        %v1720 = vmul.f32 %v1699, %v1716
        %v1721 = vmul.f32 %v1701, %v1717
        %v1722 = vpack.c.bf16 %v1718, %v1718
        %v1723 = vpack.c.bf16 %v1719, %v1719
        %v1724 = vpack.c.bf16 %v1720, %v1720
        %v1725 = vpack.c.bf16 %v1721, %v1721
        %v1727 = vsel %vm1493, %v1722, 0
        %vm1729 = vcmask 1043456
        %v1731 = vsel %vm1729, %v1480, 0
        %1733 = vmatprep.subr.bf16.mxu0 0
        %1734 = vmatpush1.bf16.msra.mxu0 %v1731
        %1735 = vmatprep.subr.bf16.mxu0 0
        %1736 = vmatpush1.bf16.msra.mxu0 0
        %1737 = vmatprep.subr.bf16.mxu0 0
        %1738 = vmatpush1.bf16.msra.mxu0 0
        %1739 = vmatprep.subr.bf16.mxu0 0
        %1740 = vmatpush1.bf16.msra.mxu0 0
        %1741 = vmatprep.subr.bf16.mxu0 0
        %1742 = vmatpush1.bf16.msra.mxu0 0
        %1743 = vmatprep.subr.bf16.mxu0 0
        %1744 = vmatpush1.bf16.msra.mxu0 0
        %1745 = vmatprep.subr.bf16.mxu0 0
        %1746 = vmatpush1.bf16.msra.mxu0 0
        %1747 = vmatprep.subr.bf16.mxu0 0
        %1748 = vmatpush1.bf16.msra.mxu0 0
        %1749 = vmatprep.subr.bf16.mxu0 0
        %1750 = vmatpush1.bf16.msra.mxu0 0
        %1751 = vmatprep.subr.bf16.mxu0 0
        %1752 = vmatpush1.bf16.msra.mxu0 0
        %1753 = vmatprep.subr.bf16.mxu0 0
        %1754 = vmatpush1.bf16.msra.mxu0 0
        %1755 = vmatprep.subr.bf16.mxu0 0
        %1756 = vmatpush1.bf16.msra.mxu0 0
        %1757 = vmatprep.subr.bf16.mxu0 0
        %1758 = vmatpush1.bf16.msra.mxu0 0
        %1759 = vmatprep.subr.bf16.mxu0 0
        %1760 = vmatpush1.bf16.msra.mxu0 0
        %1761 = vmatprep.subr.bf16.mxu0 0
        %1762 = vmatpush1.bf16.msra.mxu0 0
        %1763 = vmatprep.subr.bf16.mxu0 0
        %1764 = vmatpush1.bf16.msra.mxu0 0
        %1765 = vmatprep.mubr.bf16.mxu0 0
        %1766 = vmatmul.mubr.bf16.gmra.mrb[0].mxu0 %v1727
        %v1767 = vpop.f32.mrb[0].mxu0
        %v1768 = vadd.f32 0.0, %v1767
        %v1769 = vpop.f32.mrb[0].mxu0
        %v1770 = vpop.f32.mrb[0].mxu0
        %v1771 = vpop.f32.mrb[0].mxu0
        %1772 = vdwg.mxu0
        %v1774 = vsel %vm1493, %v1723, 0
        %v1777 = vsel %vm1729, %v1481, 0
        %1779 = vmatprep.subr.bf16.mxu0 0
        %1780 = vmatpush1.bf16.msra.mxu0 %v1777
        %1781 = vmatprep.subr.bf16.mxu0 0
        %1782 = vmatpush1.bf16.msra.mxu0 0
        %1783 = vmatprep.subr.bf16.mxu0 0
        %1784 = vmatpush1.bf16.msra.mxu0 0
        %1785 = vmatprep.subr.bf16.mxu0 0
        %1786 = vmatpush1.bf16.msra.mxu0 0
        %1787 = vmatprep.subr.bf16.mxu0 0
        %1788 = vmatpush1.bf16.msra.mxu0 0
        %1789 = vmatprep.subr.bf16.mxu0 0
        %1790 = vmatpush1.bf16.msra.mxu0 0
        %1791 = vmatprep.subr.bf16.mxu0 0
        %1792 = vmatpush1.bf16.msra.mxu0 0
        %1793 = vmatprep.subr.bf16.mxu0 0
        %1794 = vmatpush1.bf16.msra.mxu0 0
        %1795 = vmatprep.subr.bf16.mxu0 0
        %1796 = vmatpush1.bf16.msra.mxu0 0
        %1797 = vmatprep.subr.bf16.mxu0 0
        %1798 = vmatpush1.bf16.msra.mxu0 0
        %1799 = vmatprep.subr.bf16.mxu0 0
        %1800 = vmatpush1.bf16.msra.mxu0 0
        %1801 = vmatprep.subr.bf16.mxu0 0
        %1802 = vmatpush1.bf16.msra.mxu0 0
        %1803 = vmatprep.subr.bf16.mxu0 0
        %1804 = vmatpush1.bf16.msra.mxu0 0
        %1805 = vmatprep.subr.bf16.mxu0 0
        %1806 = vmatpush1.bf16.msra.mxu0 0
        %1807 = vmatprep.subr.bf16.mxu0 0
        %1808 = vmatpush1.bf16.msra.mxu0 0
        %1809 = vmatprep.subr.bf16.mxu0 0
        %1810 = vmatpush1.bf16.msra.mxu0 0
        %1811 = vmatprep.mubr.bf16.mxu0 0
        %1812 = vmatmul.mubr.bf16.gmra.mrb[0].mxu0 %v1774
        %v1813 = vpop.f32.mrb[0].mxu0
        %v1814 = vadd.f32 0.0, %v1813
        %v1815 = vpop.f32.mrb[0].mxu0
        %v1816 = vpop.f32.mrb[0].mxu0
        %v1817 = vpop.f32.mrb[0].mxu0
        %1818 = vdwg.mxu0
        %v1820 = vsel %vm1493, %v1724, 0
        %v1823 = vsel %vm1729, %v1482, 0
        %1825 = vmatprep.subr.bf16.mxu0 0
        %1826 = vmatpush1.bf16.msra.mxu0 %v1823
        %1827 = vmatprep.subr.bf16.mxu0 0
        %1828 = vmatpush1.bf16.msra.mxu0 0
        %1829 = vmatprep.subr.bf16.mxu0 0
        %1830 = vmatpush1.bf16.msra.mxu0 0
        %1831 = vmatprep.subr.bf16.mxu0 0
        %1832 = vmatpush1.bf16.msra.mxu0 0
        %1833 = vmatprep.subr.bf16.mxu0 0
        %1834 = vmatpush1.bf16.msra.mxu0 0
        %1835 = vmatprep.subr.bf16.mxu0 0
        %1836 = vmatpush1.bf16.msra.mxu0 0
        %1837 = vmatprep.subr.bf16.mxu0 0
        %1838 = vmatpush1.bf16.msra.mxu0 0
        %1839 = vmatprep.subr.bf16.mxu0 0
        %1840 = vmatpush1.bf16.msra.mxu0 0
        %1841 = vmatprep.subr.bf16.mxu0 0
        %1842 = vmatpush1.bf16.msra.mxu0 0
        %1843 = vmatprep.subr.bf16.mxu0 0
        %1844 = vmatpush1.bf16.msra.mxu0 0
        %1845 = vmatprep.subr.bf16.mxu0 0
        %1846 = vmatpush1.bf16.msra.mxu0 0
        %1847 = vmatprep.subr.bf16.mxu0 0
        %1848 = vmatpush1.bf16.msra.mxu0 0
        %1849 = vmatprep.subr.bf16.mxu0 0
        %1850 = vmatpush1.bf16.msra.mxu0 0
        %1851 = vmatprep.subr.bf16.mxu0 0
        %1852 = vmatpush1.bf16.msra.mxu0 0
        %1853 = vmatprep.subr.bf16.mxu0 0
        %1854 = vmatpush1.bf16.msra.mxu0 0
        %1855 = vmatprep.subr.bf16.mxu0 0
        %1856 = vmatpush1.bf16.msra.mxu0 0
        %1857 = vmatprep.mubr.bf16.mxu0 0
        %1858 = vmatmul.mubr.bf16.gmra.mrb[0].mxu0 %v1820
        %v1859 = vpop.f32.mrb[0].mxu0
        %v1860 = vadd.f32 0.0, %v1859
        %v1861 = vpop.f32.mrb[0].mxu0
        %v1862 = vpop.f32.mrb[0].mxu0
        %v1863 = vpop.f32.mrb[0].mxu0
        %1864 = vdwg.mxu0
        %v1866 = vsel %vm1493, %v1725, 0
        %v1869 = vsel %vm1729, %v1483, 0
        %1871 = vmatprep.subr.bf16.mxu0 0
        %1872 = vmatpush1.bf16.msra.mxu0 %v1869
        %1873 = vmatprep.subr.bf16.mxu0 0
        %1874 = vmatpush1.bf16.msra.mxu0 0
        %1875 = vmatprep.subr.bf16.mxu0 0
        %1876 = vmatpush1.bf16.msra.mxu0 0
        %1877 = vmatprep.subr.bf16.mxu0 0
        %1878 = vmatpush1.bf16.msra.mxu0 0
        %1879 = vmatprep.subr.bf16.mxu0 0
        %1880 = vmatpush1.bf16.msra.mxu0 0
        %1881 = vmatprep.subr.bf16.mxu0 0
        %1882 = vmatpush1.bf16.msra.mxu0 0
        %1883 = vmatprep.subr.bf16.mxu0 0
        %1884 = vmatpush1.bf16.msra.mxu0 0
        %1885 = vmatprep.subr.bf16.mxu0 0
        %1886 = vmatpush1.bf16.msra.mxu0 0
        %1887 = vmatprep.subr.bf16.mxu0 0
        %1888 = vmatpush1.bf16.msra.mxu0 0
        %1889 = vmatprep.subr.bf16.mxu0 0
        %1890 = vmatpush1.bf16.msra.mxu0 0
        %1891 = vmatprep.subr.bf16.mxu0 0
        %1892 = vmatpush1.bf16.msra.mxu0 0
        %1893 = vmatprep.subr.bf16.mxu0 0
        %1894 = vmatpush1.bf16.msra.mxu0 0
        %1895 = vmatprep.subr.bf16.mxu0 0
        %1896 = vmatpush1.bf16.msra.mxu0 0
        %1897 = vmatprep.subr.bf16.mxu0 0
        %1898 = vmatpush1.bf16.msra.mxu0 0
        %1899 = vmatprep.subr.bf16.mxu0 0
        %1900 = vmatpush1.bf16.msra.mxu0 0
        %1901 = vmatprep.subr.bf16.mxu0 0
        %1902 = vmatpush1.bf16.msra.mxu0 0
        %1903 = vmatprep.mubr.bf16.mxu0 0
        %1904 = vmatmul.mubr.bf16.gmra.mrb[0].mxu0 %v1866
        %v1905 = vpop.f32.mrb[0].mxu0
        %v1906 = vadd.f32 0.0, %v1905
        %v1907 = vpop.f32.mrb[0].mxu0
        %v1908 = vpop.f32.mrb[0].mxu0
        %v1909 = vpop.f32.mrb[0].mxu0
        %1910 = vdwg.mxu0
        %v1911 = vcombine.low %v1768, %v1860
        %v1912 = vcombine.high %v1768, %v1860
        %v1914 = vunpack.c.l.s4 1983009808
        %v1915 = vunpack.c.0.s8 %v1914
        %v1916 = vlaneseq
        %v1917 = vshrl.u32 %v1916, 7
        %v1918 = vsub.s32 %v1915, %v1917
        %v1919 = vrot.slane %v1911, %v1918
        %v1921 = vunpack.c.l.s4 1983009808
        %v1922 = vunpack.c.0.s8 %v1921
        %v1923 = vlaneseq
        %v1924 = vshrl.u32 %v1923, 7
        %v1925 = vsub.s32 %v1922, %v1924
        %v1926 = vrot.slane %v1912, %v1925
        %v1927 = vcombine.low %v1814, %v1906
        %v1928 = vcombine.high %v1814, %v1906
        %v1930 = vunpack.c.l.s4 1983009808
        %v1931 = vunpack.c.0.s8 %v1930
        %v1932 = vlaneseq
        %v1933 = vshrl.u32 %v1932, 7
        %v1934 = vsub.s32 %v1931, %v1933
        %v1935 = vrot.slane %v1927, %v1934
        %v1937 = vunpack.c.l.s4 1983009808
        %v1938 = vunpack.c.0.s8 %v1937
        %v1939 = vlaneseq
        %v1940 = vshrl.u32 %v1939, 7
        %v1941 = vsub.s32 %v1938, %v1940
        %v1942 = vrot.slane %v1928, %v1941
        %v1943 = vcombine.low %v1919, %v1935
        %v1944 = vcombine.high %v1919, %v1935
        %v1946 = vunpack.c.l.s4 1934713408
        %v1947 = vunpack.c.0.s8 %v1946
        %v1948 = vlaneseq
        %v1949 = vshrl.u32 %v1948, 7
        %v1950 = vsub.s32 %v1947, %v1949
        %v1951 = vrot.slane %v1943, %v1950
        %v1953 = vunpack.c.l.s4 1934713408
        %v1954 = vunpack.c.0.s8 %v1953
        %v1955 = vlaneseq
        %v1956 = vshrl.u32 %v1955, 7
        %v1957 = vsub.s32 %v1954, %v1956
        %v1958 = vrot.slane %v1944, %v1957
        %v1959 = vcombine.low %v1926, %v1942
        %v1960 = vcombine.high %v1926, %v1942
        %v1962 = vunpack.c.l.s4 1934713408
        %v1963 = vunpack.c.0.s8 %v1962
        %v1964 = vlaneseq
        %v1965 = vshrl.u32 %v1964, 7
        %v1966 = vsub.s32 %v1963, %v1965
        %v1967 = vrot.slane %v1959, %v1966
        %v1969 = vunpack.c.l.s4 1934713408
        %v1970 = vunpack.c.0.s8 %v1969
        %v1971 = vlaneseq
        %v1972 = vshrl.u32 %v1971, 7
        %v1973 = vsub.s32 %v1970, %v1972
        %v1974 = vrot.slane %v1960, %v1973
        %v1975 = vcombine.high %v1951, 0.0
        %v1976 = vcombine.high %v1958, 0.0
        %v1977 = vcombine.high %v1967, 0.0
        %v1978 = vcombine.high %v1974, 0.0
        %v1979 = vcombine.low %v1951, %v1958
        %v1981 = vunpack.c.l.s4 1983009808
        %v1982 = vunpack.c.0.s8 %v1981
        %v1983 = vlaneseq
        %v1984 = vshrl.u32 %v1983, 7
        %v1985 = vsub.s32 %v1982, %v1984
        %v1986 = vrot.slane %v1979, %v1985
        %v1987 = vcombine.low %v1975, %v1976
        %v1989 = vunpack.c.l.s4 1983009808
        %v1990 = vunpack.c.0.s8 %v1989
        %v1991 = vlaneseq
        %v1992 = vshrl.u32 %v1991, 7
        %v1993 = vsub.s32 %v1990, %v1992
        %v1994 = vrot.slane %v1987, %v1993
        %v1995 = vcombine.low %v1967, %v1974
        %v1997 = vunpack.c.l.s4 1983009808
        %v1998 = vunpack.c.0.s8 %v1997
        %v1999 = vlaneseq
        %v2000 = vshrl.u32 %v1999, 7
        %v2001 = vsub.s32 %v1998, %v2000
        %v2002 = vrot.slane %v1995, %v2001
        %v2003 = vcombine.low %v1977, %v1978
        %v2005 = vunpack.c.l.s4 1983009808
        %v2006 = vunpack.c.0.s8 %v2005
        %v2007 = vlaneseq
        %v2008 = vshrl.u32 %v2007, 7
        %v2009 = vsub.s32 %v2006, %v2008
        %v2010 = vrot.slane %v2003, %v2009
        %v2011 = vcombine.low %v1986, %v1994
        %v2012 = vcombine.high %v1986, %v1994
        %v2014 = vunpack.c.l.s4 1934713408
        %v2015 = vunpack.c.0.s8 %v2014
        %v2016 = vlaneseq
        %v2017 = vshrl.u32 %v2016, 7
        %v2018 = vsub.s32 %v2015, %v2017
        %v2019 = vrot.slane %v2011, %v2018
        %v2021 = vunpack.c.l.s4 1934713408
        %v2022 = vunpack.c.0.s8 %v2021
        %v2023 = vlaneseq
        %v2024 = vshrl.u32 %v2023, 7
        %v2025 = vsub.s32 %v2022, %v2024
        %v2026 = vrot.slane %v2012, %v2025
        %v2027 = vcombine.low %v2002, %v2010
        %v2028 = vcombine.high %v2002, %v2010
        %v2030 = vunpack.c.l.s4 1934713408
        %v2031 = vunpack.c.0.s8 %v2030
        %v2032 = vlaneseq
        %v2033 = vshrl.u32 %v2032, 7
        %v2034 = vsub.s32 %v2031, %v2033
        %v2035 = vrot.slane %v2027, %v2034
        %v2037 = vunpack.c.l.s4 1934713408
        %v2038 = vunpack.c.0.s8 %v2037
        %v2039 = vlaneseq
        %v2040 = vshrl.u32 %v2039, 7
        %v2041 = vsub.s32 %v2038, %v2040
        %v2042 = vrot.slane %v2028, %v2041
        %v2043 = vcombine.low %v2019, %v2035
        %v2044 = vcombine.high %v2019, %v2035
        %v2045 = vcombine.low %v2026, %v2042
        %v2046 = vcombine.high %v2026, %v2042
        %2048 = vrot.lane.b32.xlu0 %v2044, 8
        %v2049 = vpop.permute.xlu0 %2048
        %2052 = vrot.lane.b32.xlu0 %v2045, 16
        %v2053 = vpop.permute.xlu0 %2052
        %2056 = vrot.lane.b32.xlu0 %v2046, 24
        %v2057 = vpop.permute.xlu0 %2056
        %v2059 = vsel %vm1493, %v2043, %v2049
        %vm2060 = vcmask 130048
        %v2061 = vsel %vm2060, %v2059, %v2053
        %vm2062 = vcmask 195584
        %v2063 = vsel %vm2062, %v2061, %v2057
        %v2064 = vpack.c.bf16 %v2063, %v2063
        %v2065 = vld [vmem:[#allocation16] sm:$0xf]
        %v2066 = vld [vmem:[#allocation16 + $0x4] sm:$0xf]
        %v2067 = vld [vmem:[#allocation16 + $0x8] sm:$0xf]
        %v2068 = vld [vmem:[#allocation16 + $0xc] sm:$0xf]
        %v2069 = vld [vmem:[#allocation17] sm:$0x1]
        %v2071 = vlaneseq
        %v2072 = vshrl.u32 %v2071, 7
        %v2073 = vsub.s32 0, %v2072
        %v2074 = vrot.slane %v2069, %v2073
        %v2080 = vunpack.c.l.b16 %v2065
        %v2081 = vunpack.c.l.b16 %v2066
        %v2082 = vunpack.c.l.b16 %v2067
        %v2083 = vunpack.c.l.b16 %v2068
        %v2084 = vpack.c.b16 %v2081, %v2080
        %v2085 = vpack.c.b16 %v2083, %v2082
        %v2089 = vsel %vm863, %v2064, 0
        %2091 = vmatprep.subr.bf16.mxu0 0
        %2092 = vmatpush1.bf16.msra.mxu0 %v2084
        %2093 = vmatprep.subr.bf16.mxu0 0
        %2094 = vmatpush1.bf16.msra.mxu0 %v2085
        %2095 = vmatprep.subr.bf16.mxu0 0
        %2096 = vmatpush1.bf16.msra.mxu0 0
        %2097 = vmatprep.subr.bf16.mxu0 0
        %2098 = vmatpush1.bf16.msra.mxu0 0
        %2099 = vmatprep.subr.bf16.mxu0 0
        %2100 = vmatpush1.bf16.msra.mxu0 0
        %2101 = vmatprep.subr.bf16.mxu0 0
        %2102 = vmatpush1.bf16.msra.mxu0 0
        %2103 = vmatprep.subr.bf16.mxu0 0
        %2104 = vmatpush1.bf16.msra.mxu0 0
        %2105 = vmatprep.subr.bf16.mxu0 0
        %2106 = vmatpush1.bf16.msra.mxu0 0
        %2107 = vmatprep.subr.bf16.mxu0 0
        %2108 = vmatpush1.bf16.msra.mxu0 0
        %2109 = vmatprep.subr.bf16.mxu0 0
        %2110 = vmatpush1.bf16.msra.mxu0 0
        %2111 = vmatprep.subr.bf16.mxu0 0
        %2112 = vmatpush1.bf16.msra.mxu0 0
        %2113 = vmatprep.subr.bf16.mxu0 0
        %2114 = vmatpush1.bf16.msra.mxu0 0
        %2115 = vmatprep.subr.bf16.mxu0 0
        %2116 = vmatpush1.bf16.msra.mxu0 0
        %2117 = vmatprep.subr.bf16.mxu0 0
        %2118 = vmatpush1.bf16.msra.mxu0 0
        %2119 = vmatprep.subr.bf16.mxu0 0
        %2120 = vmatpush1.bf16.msra.mxu0 0
        %2121 = vmatprep.subr.bf16.mxu0 0
        %2122 = vmatpush1.bf16.msra.mxu0 0
        %2123 = vmatprep.mubr.bf16.mxu0 0
        %2124 = vmatmul.mubr.bf16.gmra.mrb[0].mxu0 %v2089
        %v2125 = vpop.f32.mrb[0].mxu0
        %v2126 = vadd.f32 %v2074, %v2125
        %v2127 = vpop.f32.mrb[0].mxu0
        %v2128 = vpop.f32.mrb[0].mxu0
        %v2129 = vpop.f32.mrb[0].mxu0
        %2130 = vdwg.mxu0
        %v2131 = vadd.f32 %v838, %v2126
        %v2132 = vld [vmem:[#allocation19] sm:$0x1]
        %v2133 = vld [vmem:[#allocation20] sm:$0x1]
        %v2134 = vsel %vm863, %v2131, 0.0
        %2135 = vadd.xlane.f32.xlu0 %v2134
        %v2136 = vpop.xlane.xlu0 %2135
        %v2137 = vrcp.pop 32.0
        %v2138 = vmul.f32 %v2136, %v2137
        %v2139 = vsub.f32 %v2131, %v2138
        %v2140 = vmul.f32 %v2139, %v2139
        %v2141 = vsel %vm863, %v2140, 0.0
        %2142 = vadd.xlane.f32.xlu0 %v2141
        %v2143 = vpop.xlane.xlu0 %2142
        %v2144 = vmul.f32 %v2143, %v2137
        %v2145 = vadd.f32 %v2144, 1e-05
        %v2146 = vrsqrt.pop %v2145
        %v2147 = vmul.f32 %v2139, %v2146
        %v2149 = vlaneseq
        %v2150 = vshrl.u32 %v2149, 7
        %v2151 = vsub.s32 0, %v2150
        %v2152 = vrot.slane %v2132, %v2151
        %v2154 = vmul.f32 %v2147, %v2152
        %v2156 = vlaneseq
        %v2157 = vshrl.u32 %v2156, 7
        %v2158 = vsub.s32 0, %v2157
        %v2159 = vrot.slane %v2133, %v2158
        %v2161 = vadd.f32 %v2154, %v2159
        %v2162 = vpack.c.bf16 %v2161, %v2161
        %v2163 = vld [vmem:[#allocation22] sm:$0xf]
        %v2164 = vld [vmem:[#allocation22 + $0x4] sm:$0xf]
        %v2165 = vld [vmem:[#allocation22 + $0x8] sm:$0xf]
        %v2166 = vld [vmem:[#allocation22 + $0xc] sm:$0xf]
        %v2167 = vld [vmem:[#allocation23] sm:$0x1]
        %v2169 = vlaneseq
        %v2170 = vshrl.u32 %v2169, 7
        %v2171 = vsub.s32 0, %v2170
        %v2172 = vrot.slane %v2167, %v2171
        %v2178 = vunpack.c.l.b16 %v2163
        %v2179 = vunpack.c.l.b16 %v2164
        %v2180 = vunpack.c.l.b16 %v2165
        %v2181 = vunpack.c.l.b16 %v2166
        %v2182 = vpack.c.b16 %v2179, %v2178
        %v2183 = vpack.c.b16 %v2181, %v2180
        %v2187 = vsel %vm863, %v2162, 0
        %2189 = vmatprep.subr.bf16.mxu0 0
        %2190 = vmatpush1.bf16.msra.mxu0 %v2182
        %2191 = vmatprep.subr.bf16.mxu0 0
        %2192 = vmatpush1.bf16.msra.mxu0 %v2183
        %2193 = vmatprep.subr.bf16.mxu0 0
        %2194 = vmatpush1.bf16.msra.mxu0 0
        %2195 = vmatprep.subr.bf16.mxu0 0
        %2196 = vmatpush1.bf16.msra.mxu0 0
        %2197 = vmatprep.subr.bf16.mxu0 0
        %2198 = vmatpush1.bf16.msra.mxu0 0
        %2199 = vmatprep.subr.bf16.mxu0 0
        %2200 = vmatpush1.bf16.msra.mxu0 0
        %2201 = vmatprep.subr.bf16.mxu0 0
        %2202 = vmatpush1.bf16.msra.mxu0 0
        %2203 = vmatprep.subr.bf16.mxu0 0
        %2204 = vmatpush1.bf16.msra.mxu0 0
        %2205 = vmatprep.subr.bf16.mxu0 0
        %2206 = vmatpush1.bf16.msra.mxu0 0
        %2207 = vmatprep.subr.bf16.mxu0 0
        %2208 = vmatpush1.bf16.msra.mxu0 0
        %2209 = vmatprep.subr.bf16.mxu0 0
        %2210 = vmatpush1.bf16.msra.mxu0 0
        %2211 = vmatprep.subr.bf16.mxu0 0
        %2212 = vmatpush1.bf16.msra.mxu0 0
        %2213 = vmatprep.subr.bf16.mxu0 0
        %2214 = vmatpush1.bf16.msra.mxu0 0
        %2215 = vmatprep.subr.bf16.mxu0 0
        %2216 = vmatpush1.bf16.msra.mxu0 0
        %2217 = vmatprep.subr.bf16.mxu0 0
        %2218 = vmatpush1.bf16.msra.mxu0 0
        %2219 = vmatprep.subr.bf16.mxu0 0
        %2220 = vmatpush1.bf16.msra.mxu0 0
        %2221 = vmatprep.mubr.bf16.mxu0 0
        %2222 = vmatmul.mubr.bf16.gmra.mrb[0].mxu0 %v2187
        %v2223 = vpop.f32.mrb[0].mxu0
        %v2224 = vadd.f32 %v2172, %v2223
        %v2225 = vpop.f32.mrb[0].mxu0
        %v2226 = vpop.f32.mrb[0].mxu0
        %v2227 = vpop.f32.mrb[0].mxu0
        %2228 = vdwg.mxu0
        %v2229 = vmax.f32 %v2224, 0.0
        %v2230 = vpack.c.bf16 %v2229, %v2229
        %v2231 = vld [vmem:[#allocation25] sm:$0xf]
        %v2232 = vld [vmem:[#allocation25 + $0x4] sm:$0xf]
        %v2233 = vld [vmem:[#allocation25 + $0x8] sm:$0xf]
        %v2234 = vld [vmem:[#allocation25 + $0xc] sm:$0xf]
        %v2235 = vld [vmem:[#allocation25 + $0x10] sm:$0xf]
        %v2236 = vld [vmem:[#allocation25 + $0x14] sm:$0xf]
        %v2237 = vld [vmem:[#allocation25 + $0x18] sm:$0xf]
        %v2238 = vld [vmem:[#allocation25 + $0x1c] sm:$0xf]
        %v2239 = vld [vmem:[#allocation26] sm:$0x1]
        %v2241 = vlaneseq
        %v2242 = vshrl.u32 %v2241, 7
        %v2243 = vsub.s32 0, %v2242
        %v2244 = vrot.slane %v2239, %v2243
        %v2254 = vunpack.c.l.b16 %v2231
        %v2255 = vunpack.c.l.b16 %v2232
        %v2256 = vunpack.c.l.b16 %v2233
        %v2257 = vunpack.c.l.b16 %v2234
        %v2258 = vunpack.c.l.b16 %v2235
        %v2259 = vunpack.c.l.b16 %v2236
        %v2260 = vunpack.c.l.b16 %v2237
        %v2261 = vunpack.c.l.b16 %v2238
        %v2262 = vpack.c.b16 %v2255, %v2254
        %v2263 = vpack.c.b16 %v2257, %v2256
        %v2264 = vpack.c.b16 %v2259, %v2258
        %v2265 = vpack.c.b16 %v2261, %v2260
        %vm2270 = vcmask 523264
        %v2272 = vsel %vm2270, %v2230, 0
        %2274 = vmatprep.subr.bf16.mxu0 0
        %2275 = vmatpush1.bf16.msra.mxu0 %v2262
        %2276 = vmatprep.subr.bf16.mxu0 0
        %2277 = vmatpush1.bf16.msra.mxu0 %v2263
        %2278 = vmatprep.subr.bf16.mxu0 0
        %2279 = vmatpush1.bf16.msra.mxu0 %v2264
        %2280 = vmatprep.subr.bf16.mxu0 0
        %2281 = vmatpush1.bf16.msra.mxu0 %v2265
        %2282 = vmatprep.subr.bf16.mxu0 0
        %2283 = vmatpush1.bf16.msra.mxu0 0
        %2284 = vmatprep.subr.bf16.mxu0 0
        %2285 = vmatpush1.bf16.msra.mxu0 0
        %2286 = vmatprep.subr.bf16.mxu0 0
        %2287 = vmatpush1.bf16.msra.mxu0 0
        %2288 = vmatprep.subr.bf16.mxu0 0
        %2289 = vmatpush1.bf16.msra.mxu0 0
        %2290 = vmatprep.subr.bf16.mxu0 0
        %2291 = vmatpush1.bf16.msra.mxu0 0
        %2292 = vmatprep.subr.bf16.mxu0 0
        %2293 = vmatpush1.bf16.msra.mxu0 0
        %2294 = vmatprep.subr.bf16.mxu0 0
        %2295 = vmatpush1.bf16.msra.mxu0 0
        %2296 = vmatprep.subr.bf16.mxu0 0
        %2297 = vmatpush1.bf16.msra.mxu0 0
        %2298 = vmatprep.subr.bf16.mxu0 0
        %2299 = vmatpush1.bf16.msra.mxu0 0
        %2300 = vmatprep.subr.bf16.mxu0 0
        %2301 = vmatpush1.bf16.msra.mxu0 0
        %2302 = vmatprep.subr.bf16.mxu0 0
        %2303 = vmatpush1.bf16.msra.mxu0 0
        %2304 = vmatprep.subr.bf16.mxu0 0
        %2305 = vmatpush1.bf16.msra.mxu0 0
        %2306 = vmatprep.mubr.bf16.mxu0 0
        %2307 = vmatmul.mubr.bf16.gmra.mrb[0].mxu0 %v2272
        %v2308 = vpop.f32.mrb[0].mxu0
        %v2309 = vadd.f32 %v2244, %v2308
        %v2310 = vpop.f32.mrb[0].mxu0
        %v2311 = vpop.f32.mrb[0].mxu0
        %v2312 = vpop.f32.mrb[0].mxu0
        %2313 = vdwg.mxu0
        %v2314 = vadd.f32 %v2161, %v2309
        %v2315 = vld [vmem:[#allocation28] sm:$0x1]
        %v2316 = vld [vmem:[#allocation29] sm:$0x1]
        %v2317 = vsel %vm863, %v2314, 0.0
        %2318 = vadd.xlane.f32.xlu0 %v2317
        %v2319 = vpop.xlane.xlu0 %2318
        %v2320 = vmul.f32 %v2319, %v2137
        %v2321 = vsub.f32 %v2314, %v2320
        %v2322 = vmul.f32 %v2321, %v2321
        %v2323 = vsel %vm863, %v2322, 0.0
        %2324 = vadd.xlane.f32.xlu0 %v2323
        %v2325 = vpop.xlane.xlu0 %2324
        %v2326 = vmul.f32 %v2325, %v2137
        %v2327 = vadd.f32 %v2326, 1e-05
        %v2328 = vrsqrt.pop %v2327
        %v2329 = vmul.f32 %v2321, %v2328
        %v2331 = vlaneseq
        %v2332 = vshrl.u32 %v2331, 7
        %v2333 = vsub.s32 0, %v2332
        %v2334 = vrot.slane %v2315, %v2333
        %v2336 = vmul.f32 %v2329, %v2334
        %v2338 = vlaneseq
        %v2339 = vshrl.u32 %v2338, 7
        %v2340 = vsub.s32 0, %v2339
        %v2341 = vrot.slane %v2316, %v2340
        %v2343 = vadd.f32 %v2336, %v2341
        %2344 = vst.msk [vmem:[%s836] sm:$0xff] %vm863, %v2343
        %s2345 = sand.u32 %s442, 1
        %s2346 = scalar_lea.sflag [#allocation4], %s2345
        %s2347 = sand.u32 %s442, 1
        %s2348 = smul.addr %s2347, 8
        %s2349 = scalar_lea.vmem [#allocation31], %s2348
        // Predicated region
        $region165: #{tpu_custom_call.1} parent=91 // pred_check
          %p2350 = pneg %p452
        $region166: #{tpu_custom_call.1} parent=91 // pred_check_branch
          %2352 = sbr.rel (%p2350) target = $region168
        $region167: #{tpu_custom_call.1} parent=91 // pred_region
          %s2354 = ssub.s32 128, 128
          %2355 = vsyncadd %s2346, %s2354
          %s2356 = smul.addr %s46, 128
          %s2357 = scalar_lea.hbm %s18, %s2356
          %s2359 = sshll.u32 %s2349, 4
          %s2360 = int_to_ptr.vmem [resolvable:$true] %s2359
          %2362 = dma.vmem_to_hbm [thread:$0]  %s2360, 128, %s2357, %s2346
        $region168: #{tpu_custom_call.1} parent=91 // pred_fallthru
          _
      $region92: #{tpu_custom_call.1} parent=5 // pred_fallthru
        _
      %p2363 = scmp.le.s32.totalorder 2, %s41
      // Predicated region
      $region169: #{tpu_custom_call.1} parent=5 // pred_check
        %p2364 = pneg %p2363
      $region170: #{tpu_custom_call.1} parent=5 // pred_check_branch
        %2366 = sbr.rel (%p2364) target = $region172
      $region171: #{tpu_custom_call.1} parent=5 // pred_region
        %s2367 = ssub.s32 %s41, 2
        // Predicated region
        $region173: #{tpu_custom_call.1} parent=171 // pred_check
          %p2368 = pneg %p458
        $region174: #{tpu_custom_call.1} parent=171 // pred_check_branch
          %2370 = sbr.rel (%p2368) target = $region176
        $region175: #{tpu_custom_call.1} parent=171 // pred_region
          %s2371 = sand.u32 %s443, 1
          %s2372 = scalar_lea.sflag [#allocation4], %s2371
          %s2373 = sand.u32 %s443, 1
          %s2374 = smul.addr %s2373, 8
          %s2375 = scalar_lea.vmem [#allocation31], %s2374
          %2376 = dma.done %s2372, 128
        $region176: #{tpu_custom_call.1} parent=171 // pred_fallthru
          _
      $region172: #{tpu_custom_call.1} parent=5 // pred_fallthru
        _
    $region6: #{tpu_custom_call.1} parent=1 // loop_footer
      %s45 = sadd.s32 1, %s41
    $region7: #{tpu_custom_call.1} parent=1 // loop_footer_branch
      %40 = sbr.rel target = $region3
    $region8: #{tpu_custom_call.1} parent=1 // loop_exit
      _
    %2377 = vsyncpa [#allocation3], 1
    %s2378 = scalar_lea.sflag [#allocation3], 1
    %2379 = vsyncpa %s2378, 1
    %2380 = vsyncpa [#allocation6], 1
    %s2381 = scalar_lea.sflag [#allocation6], 1
    %2382 = vsyncpa %s2381, 1
    %2383 = vsyncpa [#allocation9], 1
    %2384 = vsyncpa [#allocation12], 1
    %2385 = vsyncpa [#allocation15], 1
    %2386 = vsyncpa [#allocation18], 1
    %2387 = vsyncpa [#allocation21], 1
    %2388 = vsyncpa [#allocation24], 1
    %2389 = vsyncpa [#allocation27], 1
    %2390 = vsyncpa [#allocation30], 1
    %2391 = vsyncpa [#allocation4], 1
    %s2392 = scalar_lea.sflag [#allocation4], 1
    %2393 = vsyncpa %s2392, 1

</llo_original>
